<compile_context>
chip_gen: v5e
topology: v5e:2x2
jax: 0.10.0
libtpu: 0.0.40
codegen_flags: <defaults>
</compile_context>

<pallas_src>
import functools

import jax
import jax.numpy as jnp
from jax.experimental import pallas as pl
from jax.experimental.pallas import tpu as pltpu


# ---------------------------------------------------------------------------
# Kernel
# ---------------------------------------------------------------------------
def btadapter_temp_kernel(
    x_ref,                       # (S, T, M)  block of temporal sequences
    gamma_ref, beta_ref,         # (1, M)     LayerNorm affine (f32)
    wqkv_ref, bqkv_ref,          # (M, 3M) bf16, (1, 3M) f32  (scale folded into q)
    wproj_ref, bproj_ref,        # (M, M)  bf16, (1, M)  f32
    wfc_ref, bfc_ref,            # (M, M)  bf16, (1, M)  f32   temporal_fc
    o_ref,                       # (S, T, M)
    *, num_heads, eps,
):
    S, T, M = x_ref.shape
    H = num_heads
    hd = M // H

    x = x_ref[...].astype(jnp.float32)
    x2 = x.reshape(S * T, M)                       # merge leading dims (no relayout)

    # ---- norm1: LayerNorm(eps=1e-6), var via E[x^2] - mu^2 (one sweep) ----
    mu = jnp.mean(x2, axis=-1, keepdims=True)
    ex2 = jnp.mean(x2 * x2, axis=-1, keepdims=True)
    var = jnp.maximum(ex2 - mu * mu, 0.0)
    xn = (x2 - mu) * jax.lax.rsqrt(var + eps)
    xn = xn * gamma_ref[...] + beta_ref[...]

    # ---- qkv projection: (S*T, M) @ (M, 3M), bf16 MXU, f32 accumulate ----
    # (EVA Attention with qkv_bias=True: k-bias is zero; baked into b_qkv.
    #  The 1/sqrt(hd) attention scale is pre-folded into the q columns.)
    qkv = jnp.dot(xn.astype(jnp.bfloat16), wqkv_ref[...],
                  preferred_element_type=jnp.float32) + bqkv_ref[...]
    q = qkv[:, 0 * M:1 * M].reshape(S, T, M)
    k = qkv[:, 1 * M:2 * M].reshape(S, T, M)
    v = qkv[:, 2 * M:3 * M].reshape(S, T, M)

    # ---- head-fused attention over time, batched over (head, sequence) ----
    # Build (H*S, T, hd) with head-major batch order via lane slices + axis-0
    # concat (avoids an arbitrary 4-D transpose, which Mosaic may not lower).
    def to_batched_heads(a):                       # (S, T, M) -> (H*S, T, hd)
        return jnp.concatenate(
            [a[:, :, h * hd:(h + 1) * hd] for h in range(H)], axis=0)

    qh = to_batched_heads(q).astype(jnp.bfloat16)
    kh = to_batched_heads(k).astype(jnp.bfloat16)
    vh = to_batched_heads(v).astype(jnp.bfloat16)

    s = jnp.einsum("bqd,bkd->bqk", qh, kh,
                   preferred_element_type=jnp.float32)         # (H*S, T, T)
    s = s - jnp.max(s, axis=-1, keepdims=True)
    p = jnp.exp(s)
    p = p * pl.reciprocal(jnp.sum(p, axis=-1, keepdims=True),
                          approx=True)                          # EUP, not VALU
    o = jnp.einsum("bqk,bkd->bqd", p.astype(jnp.bfloat16), vh,
                   preferred_element_type=jnp.float32)          # (H*S, T, hd)

    # Re-assemble heads onto the channel axis (leading-dim slices are free).
    attn_out = jnp.concatenate(
        [o[h * S:(h + 1) * S] for h in range(H)], axis=-1)      # (S, T, M)
    attn_out = attn_out.reshape(S * T, M)

    # ---- attention output projection (bf16 MXU, f32 acc) ----
    y = jnp.dot(attn_out.astype(jnp.bfloat16), wproj_ref[...],
                preferred_element_type=jnp.float32) + bproj_ref[...]

    # DropPath is identity at inference time.
    # ---- temporal_fc (constant_init(val=0, bias=0) in the module __init__) ----
    y = jnp.dot(y.astype(jnp.bfloat16), wfc_ref[...],
                preferred_element_type=jnp.float32) + bfc_ref[...]

    # ---- residual add on the un-normalized tokens ----
    o_ref[...] = (y + x2).reshape(S, T, M).astype(o_ref.dtype)


# ---------------------------------------------------------------------------
# Feature probe: single-buffered loop-invariant blocks (pl.Buffered(1))
# ---------------------------------------------------------------------------
@functools.lru_cache(maxsize=None)
def _single_buffer_weights_supported():
    """Detect support for pipeline_mode=pl.Buffered(1) on constant-index blocks."""
    if not hasattr(pl, "Buffered"):
        return False

    def _copy(x_ref, o_ref):
        o_ref[...] = x_ref[...]

    try:
        x = jnp.arange(8 * 128, dtype=jnp.float32).reshape(8, 128)
        f = pl.pallas_call(
            _copy,
            grid=(2,),
            in_specs=[pl.BlockSpec((8, 128), lambda i: (0, 0),
                                   pipeline_mode=pl.Buffered(1))],
            out_specs=pl.BlockSpec((8, 128), lambda i: (i, 0)),
            out_shape=jax.ShapeDtypeStruct((16, 128), jnp.float32),
        )
        y = jax.block_until_ready(f(x))
        return bool(jnp.array_equal(y, jnp.tile(x, (2, 1))))
    except Exception:
        return False


# ---------------------------------------------------------------------------
# VMEM budget: weights x buffer count + activation blocks + f32 intermediates
# ---------------------------------------------------------------------------
def _vmem_limit_bytes(S, T, M, num_heads, act_itemsize, weight_buffers):
    rows = S * T
    weights = 5 * M * M * 2                        # (M,3M)+(M,M)+(M,M) bf16
    biases = 7 * M * 4                             # qkv/proj/fc biases + gamma/beta
    act = 2 * 2 * rows * M * act_itemsize          # in + aliased out, double-buffered
    interm = rows * 8 * M * 4                      # x2/xn/qkv/q/k/v/attn_out/y (f32)
    interm += 2 * num_heads * S * T * T * 4        # scores + probs
    est = weight_buffers * (weights + biases) + act + interm
    limit = int(est * 1.2) + (8 << 20)             # headroom for Mosaic scratch
    try:
        cap = int(getattr(pltpu.get_tpu_info(), "vmem_capacity_bytes", 64 << 20))
    except Exception:
        cap = 64 << 20
    return max(32 << 20, min(limit, int(cap * 0.85)))


# ---------------------------------------------------------------------------
# One-time parameter preprocessing (do NOT put this inside the per-step jit)
# ---------------------------------------------------------------------------
def prepare_params(params, num_heads):
    """Transpose weights, cast to bf16, fold the attention scale into W_q/b_q."""
    M = params["w_proj"].shape[0]
    hd = M // num_heads
    scale = float(hd) ** -0.5

    w_qkv = params["w_qkv"].astype(jnp.float32)            # (3M, M)
    b_qkv = params["b_qkv"].reshape(-1).astype(jnp.float32)  # (3M,)
    # Fold softmax scale into the query projection rows [0, M).
    # NOTE: when loading real EVA checkpoints, assert the k-bias slice is zero.
    w_qkv = w_qkv.at[:M].multiply(scale)
    b_qkv = b_qkv.at[:M].multiply(scale)

    return {
        "gamma": params["gamma"].reshape(1, M).astype(jnp.float32),
        "beta": params["beta"].reshape(1, M).astype(jnp.float32),
        "w_qkv_t": w_qkv.T.astype(jnp.bfloat16),             # (M, 3M)
        "b_qkv": b_qkv.reshape(1, 3 * M),
        "w_proj_t": params["w_proj"].T.astype(jnp.bfloat16),  # (M, M)
        "b_proj": params["b_proj"].reshape(1, M).astype(jnp.float32),
        "w_fc_t": params["w_fc"].T.astype(jnp.bfloat16),      # (M, M)
        "b_fc": params["b_fc"].reshape(1, M).astype(jnp.float32),
    }


# ---------------------------------------------------------------------------
# Wrapper
# ---------------------------------------------------------------------------
def btadapter_temp(x, prep, *, T, num_heads, rows_per_step=256):
    """x: [B, 1 + P*T, M] -> [B, 1 + P*T, M].  `prep` = prepare_params(...)."""
    B, N, M = x.shape
    PT = N - 1
    P = PT // T
    total = B * P
    assert P * T == PT and M % num_heads == 0

    cls_tok = x[:, :1, :]
    query = x[:, 1:, :].reshape(total, T, M)       # one row per (batch, patch)

    # Sequences per grid step: ~rows_per_step LHS rows per GEMM.
    # 256 suits v5e/v7x; on v6e raise rows_per_step to 512-1024 (128 MiB VMEM).
    S = max(1, min(rows_per_step // max(T, 1), total))
    # Pad B*P up to a multiple of S (never shrink S to an 8-row LHS).
    padded_total = -(-total // S) * S
    pad = padded_total - total
    if pad:
        query = jnp.concatenate(
            [query, jnp.zeros((pad, T, M), query.dtype)], axis=0)
    G = padded_total // S
    # NOTE(v7x): with dimension_semantics=("parallel",) the grid shards across
    # 2 TensorCores; keep G >= a few per core before raising rows_per_step.

    single_buf = _single_buffer_weights_supported()

    def rep_spec(arr):
        nd = arr.ndim
        idx = lambda i, _nd=nd: (0,) * _nd
        if single_buf:
            # Loop-invariant block: no point double-buffering it.
            return pl.BlockSpec(arr.shape, idx, pipeline_mode=pl.Buffered(1))
        return pl.BlockSpec(arr.shape, idx)

    kernel = functools.partial(btadapter_temp_kernel,
                               num_heads=num_heads, eps=1e-6)

    grid_spec = pl.GridSpec(
        grid=(G,),
        in_specs=[
            pl.BlockSpec((S, T, M), lambda i: (i, 0, 0)),   # activation block
            rep_spec(prep["gamma"]), rep_spec(prep["beta"]),
            rep_spec(prep["w_qkv_t"]), rep_spec(prep["b_qkv"]),
            rep_spec(prep["w_proj_t"]), rep_spec(prep["b_proj"]),
            rep_spec(prep["w_fc_t"]), rep_spec(prep["b_fc"]),
        ],
        out_specs=pl.BlockSpec((S, T, M), lambda i: (i, 0, 0)),
    )

    vmem_limit = _vmem_limit_bytes(
        S, T, M, num_heads, jnp.dtype(x.dtype).itemsize,
        weight_buffers=1 if single_buf else 2)

    out = pl.pallas_call(
        kernel,
        grid_spec=grid_spec,
        out_shape=jax.ShapeDtypeStruct((padded_total, T, M), x.dtype),
        input_output_aliases={0: 0},     # write back in place of `query`
        compiler_params=pltpu.CompilerParams(
            dimension_semantics=("parallel",),
            vmem_limit_bytes=vmem_limit),
    )(query,
      prep["gamma"], prep["beta"],
      prep["w_qkv_t"], prep["b_qkv"],
      prep["w_proj_t"], prep["b_proj"],
      prep["w_fc_t"], prep["b_fc"])

    out = out[:total].reshape(B, P * T, M)
    return jnp.concatenate([cls_tok, out], axis=1)


# ---------------------------------------------------------------------------
# Pure-JAX (f32) reference mirroring the PyTorch forward, for verification
# ---------------------------------------------------------------------------
def btadapter_temp_reference(x, T, params, num_heads):
    B, N, M = x.shape
    P = (N - 1) // T
    hd = M // num_heads
    scale = float(hd) ** -0.5

    residual = x[:, 1:, :]
    cls_tok = x[:, :1, :]
    xs = residual.reshape(B * P, T, M)

    mu = jnp.mean(xs, axis=-1, keepdims=True)
    var = jnp.mean((xs - mu) ** 2, axis=-1, keepdims=True)
    xn = (xs - mu) * jax.lax.rsqrt(var + 1e-6)
    xn = xn * params["gamma"][0] + params["beta"][0]

    qkv = xn @ params["w_qkv"].T + params["b_qkv"][0]
    q, k, v = jnp.split(qkv, 3, axis=-1)

    def heads(a):  # (S, T, M) -> (S, H, T, hd)
        return a.reshape(B * P, T, num_heads, hd).transpose(0, 2, 1, 3)

    qh, kh, vh = heads(q) * scale, heads(k), heads(v)
    s = jnp.einsum("bhqd,bhkd->bhqk", qh, kh)
    p = jax.nn.softmax(s, axis=-1)
    o = jnp.einsum("bhqk,bhkd->bhqd", p, vh)
    o = o.transpose(0, 2, 1, 3).reshape(B * P, T, M)

    o = o @ params["w_proj"].T + params["b_proj"][0]
    o = o @ params["w_fc"].T + params["b_fc"][0]
    o = o.reshape(B, P * T, M) + residual
    return jnp.concatenate([cls_tok, o], axis=1)


def make_params(key, d_model, zero_temporal_fc=True):
    M = d_model
    k = jax.random.split(key, 6)
    w_qkv = 0.02 * jax.random.normal(k[0], (3 * M, M), jnp.float32)
    # EVA Attention with qkv_bias=True: q_bias & v_bias learned, k_bias == 0.
    q_bias = 0.02 * jax.random.normal(k[1], (M,), jnp.float32)
    v_bias = 0.02 * jax.random.normal(k[2], (M,), jnp.float32)
    b_qkv = jnp.concatenate([q_bias, jnp.zeros((M,), jnp.float32), v_bias])
    params = {
        "gamma": jnp.ones((1, M), jnp.float32),
        "beta": jnp.zeros((1, M), jnp.float32),
        "w_qkv": w_qkv,
        "b_qkv": b_qkv.reshape(1, 3 * M),
        "w_proj": 0.02 * jax.random.normal(k[3], (M, M), jnp.float32),
        "b_proj": 0.02 * jax.random.normal(k[4], (1, M), jnp.float32),
    }
    if zero_temporal_fc:
        # constant_init(self.temporal_fc, val=0, bias=0) in the module __init__.
        params["w_fc"] = jnp.zeros((M, M), jnp.float32)
        params["b_fc"] = jnp.zeros((1, M), jnp.float32)
    else:
        params["w_fc"] = 0.02 * jax.random.normal(k[5], (M, M), jnp.float32)
        params["b_fc"] = jnp.zeros((1, M), jnp.float32)
    return params


if __name__ == "__main__":
    # Small shapes: B=2, d_model=32, heads=4, T=8 frames, P=4 spatial patches.
    B, M, H, T, P = 2, 32, 4, 8, 4
    N = 1 + P * T

    key = jax.random.PRNGKey(0)
    kx, kp = jax.random.split(key)
    x = jax.random.normal(kx, (B, N, M), jnp.float32)

    fwd = jax.jit(functools.partial(btadapter_temp, T=T, num_heads=H))

    # Faithful run (temporal_fc zero-initialized per the module's __init__):
    # the whole block is exactly the identity in that configuration.
    params = make_params(kp, M, zero_temporal_fc=True)
    prep = prepare_params(params, H)
    out = jax.block_until_ready(fwd(x, prep))
    assert out.shape == (B, N, M)
    assert jnp.allclose(out, x, atol=1e-5), "zero-init temporal_fc should be identity"

    # Verification of the full compute path against a pure-JAX f32 reference,
    # using a non-zero temporal_fc so the attention path is visible.  The
    # kernel runs its GEMMs in bf16 (f32 accumulate), so use a matching
    # tolerance.
    params_nz = make_params(kp, M, zero_temporal_fc=False)
    prep_nz = prepare_params(params_nz, H)
    got = jax.block_until_ready(fwd(x, prep_nz))
    want = btadapter_temp_reference(x, T, params_nz, num_heads=H)
    assert jnp.allclose(got, want, atol=1e-2, rtol=1e-2), "kernel mismatch"

    print("KERNEL_OK")
</pallas_src>

<mosaic_0001>
module attributes {stable_mosaic.version = 11 : i64} {
  func.func @btadapter_temp_kernel(%arg0: i32, %arg1: memref<8x8x32xf32, #tpu.memory_space<vmem>>, %arg2: memref<1x32xf32, #tpu.memory_space<vmem>>, %arg3: memref<1x32xf32, #tpu.memory_space<vmem>>, %arg4: memref<32x96xbf16, #tpu.memory_space<vmem>>, %arg5: memref<1x96xf32, #tpu.memory_space<vmem>>, %arg6: memref<32x32xbf16, #tpu.memory_space<vmem>>, %arg7: memref<1x32xf32, #tpu.memory_space<vmem>>, %arg8: memref<32x32xbf16, #tpu.memory_space<vmem>>, %arg9: memref<1x32xf32, #tpu.memory_space<vmem>>, %arg10: memref<8x8x32xf32, #tpu.memory_space<vmem>>) attributes {dimension_semantics = [#tpu.dimension_semantics<parallel>], iteration_bounds = array<i64: 1>, scalar_prefetch = 0 : i64, scratch_operands = 0 : i64, tpu.core_type = #tpu.core_type<tc>, window_params = [{transform_indices = @transform_0, window_bounds = array<i64: 8, 8, 32>}, {pipeline_mode = #tpu.pipeline_mode<synchronous>, transform_indices = @transform_1, window_bounds = array<i64: 1, 32>}, {pipeline_mode = #tpu.pipeline_mode<synchronous>, transform_indices = @transform_2, window_bounds = array<i64: 1, 32>}, {pipeline_mode = #tpu.pipeline_mode<synchronous>, transform_indices = @transform_3, window_bounds = array<i64: 32, 96>}, {pipeline_mode = #tpu.pipeline_mode<synchronous>, transform_indices = @transform_4, window_bounds = array<i64: 1, 96>}, {pipeline_mode = #tpu.pipeline_mode<synchronous>, transform_indices = @transform_5, window_bounds = array<i64: 32, 32>}, {pipeline_mode = #tpu.pipeline_mode<synchronous>, transform_indices = @transform_6, window_bounds = array<i64: 1, 32>}, {pipeline_mode = #tpu.pipeline_mode<synchronous>, transform_indices = @transform_7, window_bounds = array<i64: 32, 32>}, {pipeline_mode = #tpu.pipeline_mode<synchronous>, transform_indices = @transform_8, window_bounds = array<i64: 1, 32>}, {transform_indices = @transform_9, window_bounds = array<i64: 8, 8, 32>}]} {
    %c0 = arith.constant 0 : index
    %c0_0 = arith.constant 0 : index
    %c0_1 = arith.constant 0 : index
    %0 = vector.load %arg1[%c0, %c0_0, %c0_1] : memref<8x8x32xf32, #tpu.memory_space<vmem>>, vector<8x8x32xf32>
    %1 = vector.shape_cast %0 : vector<8x8x32xf32> to vector<64x32xf32>
    %cst = arith.constant dense<0.000000e+00> : vector<64xf32>
    %2 = vector.multi_reduction <add>, %1, %cst [1] : vector<64x32xf32> to vector<64xf32>
    %3 = vector.shape_cast %2 : vector<64xf32> to vector<64x1xf32>
    %cst_2 = arith.constant 3.200000e+01 : f32
    %4 = vector.broadcast %cst_2 : f32 to vector<64x1xf32>
    %5 = arith.divf %3, %4 : vector<64x1xf32>
    %6 = arith.mulf %1, %1 : vector<64x32xf32>
    %cst_3 = arith.constant dense<0.000000e+00> : vector<64xf32>
    %7 = vector.multi_reduction <add>, %6, %cst_3 [1] : vector<64x32xf32> to vector<64xf32>
    %8 = vector.shape_cast %7 : vector<64xf32> to vector<64x1xf32>
    %cst_4 = arith.constant 3.200000e+01 : f32
    %9 = vector.broadcast %cst_4 : f32 to vector<64x1xf32>
    %10 = arith.divf %8, %9 : vector<64x1xf32>
    %11 = arith.mulf %5, %5 : vector<64x1xf32>
    %12 = arith.subf %10, %11 : vector<64x1xf32>
    %cst_5 = arith.constant 0.000000e+00 : f32
    %13 = vector.broadcast %cst_5 : f32 to vector<64x1xf32>
    %14 = arith.maximumf %12, %13 : vector<64x1xf32>
    %15 = vector.broadcast %5 : vector<64x1xf32> to vector<64x32xf32>
    %16 = arith.subf %1, %15 : vector<64x32xf32>
    %cst_6 = arith.constant 9.99999997E-7 : f32
    %17 = vector.broadcast %cst_6 : f32 to vector<64x1xf32>
    %18 = arith.addf %14, %17 : vector<64x1xf32>
    %19 = math.rsqrt %18 : vector<64x1xf32>
    %20 = vector.broadcast %19 : vector<64x1xf32> to vector<64x32xf32>
    %21 = arith.mulf %16, %20 : vector<64x32xf32>
    %c0_7 = arith.constant 0 : index
    %c0_8 = arith.constant 0 : index
    %22 = vector.load %arg2[%c0_7, %c0_8] : memref<1x32xf32, #tpu.memory_space<vmem>>, vector<1x32xf32>
    %23 = vector.broadcast %22 : vector<1x32xf32> to vector<64x32xf32>
    %24 = arith.mulf %21, %23 : vector<64x32xf32>
    %c0_9 = arith.constant 0 : index
    %c0_10 = arith.constant 0 : index
    %25 = vector.load %arg3[%c0_9, %c0_10] : memref<1x32xf32, #tpu.memory_space<vmem>>, vector<1x32xf32>
    %26 = vector.broadcast %25 : vector<1x32xf32> to vector<64x32xf32>
    %27 = arith.addf %24, %26 : vector<64x32xf32>
    %28 = arith.truncf %27 : vector<64x32xf32> to vector<64x32xbf16>
    %c0_11 = arith.constant 0 : index
    %c0_12 = arith.constant 0 : index
    %29 = vector.load %arg4[%c0_11, %c0_12] : memref<32x96xbf16, #tpu.memory_space<vmem>>, vector<32x96xbf16>
    %cst_13 = arith.constant dense<0.000000e+00> : vector<64x96xf32>
    %30 = tpu.matmul %28, %29, %cst_13 {dimension_numbers = #tpu.dot_dimension_numbers<[1], [0], [0], [1], [0, 0, 1, 1], [], []>} : vector<64x32xbf16>, vector<32x96xbf16>, vector<64x96xf32> -> vector<64x96xf32>
    %c0_14 = arith.constant 0 : index
    %c0_15 = arith.constant 0 : index
    %31 = vector.load %arg5[%c0_14, %c0_15] : memref<1x96xf32, #tpu.memory_space<vmem>>, vector<1x96xf32>
    %32 = vector.broadcast %31 : vector<1x96xf32> to vector<64x96xf32>
    %33 = arith.addf %30, %32 : vector<64x96xf32>
    %34 = vector.extract_strided_slice %33 {offsets = [0, 0], sizes = [64, 32], strides = [1, 1]} : vector<64x96xf32> to vector<64x32xf32>
    %35 = vector.shape_cast %34 : vector<64x32xf32> to vector<8x8x32xf32>
    %36 = vector.extract_strided_slice %33 {offsets = [0, 32], sizes = [64, 32], strides = [1, 1]} : vector<64x96xf32> to vector<64x32xf32>
    %37 = vector.shape_cast %36 : vector<64x32xf32> to vector<8x8x32xf32>
    %38 = vector.extract_strided_slice %33 {offsets = [0, 64], sizes = [64, 32], strides = [1, 1]} : vector<64x96xf32> to vector<64x32xf32>
    %39 = vector.shape_cast %38 : vector<64x32xf32> to vector<8x8x32xf32>
    %40 = vector.extract_strided_slice %35 {offsets = [0, 0, 0], sizes = [8, 8, 8], strides = [1, 1, 1]} : vector<8x8x32xf32> to vector<8x8x8xf32>
    %41 = vector.extract_strided_slice %35 {offsets = [0, 0, 8], sizes = [8, 8, 8], strides = [1, 1, 1]} : vector<8x8x32xf32> to vector<8x8x8xf32>
    %42 = vector.extract_strided_slice %35 {offsets = [0, 0, 16], sizes = [8, 8, 8], strides = [1, 1, 1]} : vector<8x8x32xf32> to vector<8x8x8xf32>
    %43 = vector.extract_strided_slice %35 {offsets = [0, 0, 24], sizes = [8, 8, 8], strides = [1, 1, 1]} : vector<8x8x32xf32> to vector<8x8x8xf32>
    %44 = tpu.concatenate %40, %41, %42, %43 in 0 : vector<8x8x8xf32>, vector<8x8x8xf32>, vector<8x8x8xf32>, vector<8x8x8xf32> -> vector<32x8x8xf32>
    %45 = arith.truncf %44 : vector<32x8x8xf32> to vector<32x8x8xbf16>
    %46 = vector.extract_strided_slice %37 {offsets = [0, 0, 0], sizes = [8, 8, 8], strides = [1, 1, 1]} : vector<8x8x32xf32> to vector<8x8x8xf32>
    %47 = vector.extract_strided_slice %37 {offsets = [0, 0, 8], sizes = [8, 8, 8], strides = [1, 1, 1]} : vector<8x8x32xf32> to vector<8x8x8xf32>
    %48 = vector.extract_strided_slice %37 {offsets = [0, 0, 16], sizes = [8, 8, 8], strides = [1, 1, 1]} : vector<8x8x32xf32> to vector<8x8x8xf32>
    %49 = vector.extract_strided_slice %37 {offsets = [0, 0, 24], sizes = [8, 8, 8], strides = [1, 1, 1]} : vector<8x8x32xf32> to vector<8x8x8xf32>
    %50 = tpu.concatenate %46, %47, %48, %49 in 0 : vector<8x8x8xf32>, vector<8x8x8xf32>, vector<8x8x8xf32>, vector<8x8x8xf32> -> vector<32x8x8xf32>
    %51 = arith.truncf %50 : vector<32x8x8xf32> to vector<32x8x8xbf16>
    %52 = vector.extract_strided_slice %39 {offsets = [0, 0, 0], sizes = [8, 8, 8], strides = [1, 1, 1]} : vector<8x8x32xf32> to vector<8x8x8xf32>
    %53 = vector.extract_strided_slice %39 {offsets = [0, 0, 8], sizes = [8, 8, 8], strides = [1, 1, 1]} : vector<8x8x32xf32> to vector<8x8x8xf32>
    %54 = vector.extract_strided_slice %39 {offsets = [0, 0, 16], sizes = [8, 8, 8], strides = [1, 1, 1]} : vector<8x8x32xf32> to vector<8x8x8xf32>
    %55 = vector.extract_strided_slice %39 {offsets = [0, 0, 24], sizes = [8, 8, 8], strides = [1, 1, 1]} : vector<8x8x32xf32> to vector<8x8x8xf32>
    %56 = tpu.concatenate %52, %53, %54, %55 in 0 : vector<8x8x8xf32>, vector<8x8x8xf32>, vector<8x8x8xf32>, vector<8x8x8xf32> -> vector<32x8x8xf32>
    %57 = arith.truncf %56 : vector<32x8x8xf32> to vector<32x8x8xbf16>
    "tpu.trace_start"() <{level = 10 : i32, message = "bqd,bkd->bqk"}> : () -> ()
    %cst_16 = arith.constant dense<0.000000e+00> : vector<32x8x8xf32>
    %58 = tpu.matmul %45, %51, %cst_16 {dimension_numbers = #tpu.dot_dimension_numbers<[2], [2], [1], [1], [0, 0, 0, 1, 1, 1], [0], [0]>} : vector<32x8x8xbf16>, vector<32x8x8xbf16>, vector<32x8x8xf32> -> vector<32x8x8xf32>
    "tpu.trace_stop"() : () -> ()
    %cst_17 = arith.constant dense<0xFF800000> : vector<32x8xf32>
    %59 = vector.multi_reduction <maximumf>, %58, %cst_17 [2] : vector<32x8x8xf32> to vector<32x8xf32>
    %60 = vector.shape_cast %59 : vector<32x8xf32> to vector<32x8x1xf32>
    %61 = vector.broadcast %60 : vector<32x8x1xf32> to vector<32x8x8xf32>
    %62 = arith.subf %58, %61 : vector<32x8x8xf32>
    %63 = math.exp %62 : vector<32x8x8xf32>
    %cst_18 = arith.constant dense<0.000000e+00> : vector<32x8xf32>
    %64 = vector.multi_reduction <add>, %63, %cst_18 [2] : vector<32x8x8xf32> to vector<32x8xf32>
    %65 = vector.shape_cast %64 : vector<32x8xf32> to vector<32x8x1xf32>
    %66 = tpu.reciprocal %65 {approx = true} : vector<32x8x1xf32> -> vector<32x8x1xf32>
    %67 = vector.broadcast %66 : vector<32x8x1xf32> to vector<32x8x8xf32>
    %68 = arith.mulf %63, %67 : vector<32x8x8xf32>
    %69 = arith.truncf %68 : vector<32x8x8xf32> to vector<32x8x8xbf16>
    "tpu.trace_start"() <{level = 10 : i32, message = "bqk,bkd->bqd"}> : () -> ()
    %cst_19 = arith.constant dense<0.000000e+00> : vector<32x8x8xf32>
    %70 = tpu.matmul %69, %57, %cst_19 {dimension_numbers = #tpu.dot_dimension_numbers<[2], [1], [1], [2], [0, 0, 0, 1, 1, 2], [0], [0]>} : vector<32x8x8xbf16>, vector<32x8x8xbf16>, vector<32x8x8xf32> -> vector<32x8x8xf32>
    "tpu.trace_stop"() : () -> ()
    %71 = vector.extract_strided_slice %70 {offsets = [0, 0, 0], sizes = [8, 8, 8], strides = [1, 1, 1]} : vector<32x8x8xf32> to vector<8x8x8xf32>
    %72 = vector.extract_strided_slice %70 {offsets = [8, 0, 0], sizes = [8, 8, 8], strides = [1, 1, 1]} : vector<32x8x8xf32> to vector<8x8x8xf32>
    %73 = vector.extract_strided_slice %70 {offsets = [16, 0, 0], sizes = [8, 8, 8], strides = [1, 1, 1]} : vector<32x8x8xf32> to vector<8x8x8xf32>
    %74 = vector.extract_strided_slice %70 {offsets = [24, 0, 0], sizes = [8, 8, 8], strides = [1, 1, 1]} : vector<32x8x8xf32> to vector<8x8x8xf32>
    %75 = tpu.concatenate %71, %72, %73, %74 in 2 : vector<8x8x8xf32>, vector<8x8x8xf32>, vector<8x8x8xf32>, vector<8x8x8xf32> -> vector<8x8x32xf32>
    %76 = vector.shape_cast %75 : vector<8x8x32xf32> to vector<64x32xf32>
    %77 = arith.truncf %76 : vector<64x32xf32> to vector<64x32xbf16>
    %c0_20 = arith.constant 0 : index
    %c0_21 = arith.constant 0 : index
    %78 = vector.load %arg6[%c0_20, %c0_21] : memref<32x32xbf16, #tpu.memory_space<vmem>>, vector<32x32xbf16>
    %cst_22 = arith.constant dense<0.000000e+00> : vector<64x32xf32>
    %79 = tpu.matmul %77, %78, %cst_22 {dimension_numbers = #tpu.dot_dimension_numbers<[1], [0], [0], [1], [0, 0, 1, 1], [], []>} : vector<64x32xbf16>, vector<32x32xbf16>, vector<64x32xf32> -> vector<64x32xf32>
    %c0_23 = arith.constant 0 : index
    %c0_24 = arith.constant 0 : index
    %80 = vector.load %arg7[%c0_23, %c0_24] : memref<1x32xf32, #tpu.memory_space<vmem>>, vector<1x32xf32>
    %81 = vector.broadcast %80 : vector<1x32xf32> to vector<64x32xf32>
    %82 = arith.addf %79, %81 : vector<64x32xf32>
    %83 = arith.truncf %82 : vector<64x32xf32> to vector<64x32xbf16>
    %c0_25 = arith.constant 0 : index
    %c0_26 = arith.constant 0 : index
    %84 = vector.load %arg8[%c0_25, %c0_26] : memref<32x32xbf16, #tpu.memory_space<vmem>>, vector<32x32xbf16>
    %cst_27 = arith.constant dense<0.000000e+00> : vector<64x32xf32>
    %85 = tpu.matmul %83, %84, %cst_27 {dimension_numbers = #tpu.dot_dimension_numbers<[1], [0], [0], [1], [0, 0, 1, 1], [], []>} : vector<64x32xbf16>, vector<32x32xbf16>, vector<64x32xf32> -> vector<64x32xf32>
    %c0_28 = arith.constant 0 : index
    %c0_29 = arith.constant 0 : index
    %86 = vector.load %arg9[%c0_28, %c0_29] : memref<1x32xf32, #tpu.memory_space<vmem>>, vector<1x32xf32>
    %87 = vector.broadcast %86 : vector<1x32xf32> to vector<64x32xf32>
    %88 = arith.addf %85, %87 : vector<64x32xf32>
    %89 = arith.addf %88, %1 : vector<64x32xf32>
    %90 = vector.shape_cast %89 : vector<64x32xf32> to vector<8x8x32xf32>
    %c0_30 = arith.constant 0 : index
    %c0_31 = arith.constant 0 : index
    %c0_32 = arith.constant 0 : index
    %91 = vector.load %arg10[%c0_30, %c0_31, %c0_32] : memref<8x8x32xf32, #tpu.memory_space<vmem>>, vector<8x8x32xf32>
    tpu.vector_store %arg10[%c0_30, %c0_31, %c0_32], %90 {strides = array<i32>} : memref<8x8x32xf32, #tpu.memory_space<vmem>>, vector<8x8x32xf32>,
    return
  }
  func.func @transform_0(%arg0: i32) -> (i32, i32, i32) {
    %c0_i32 = arith.constant 0 : i32
    %c0_i32_0 = arith.constant 0 : i32
    %c0_i32_1 = arith.constant 0 : i32
    return %arg0, %c0_i32, %c0_i32_0 : i32, i32, i32
  }
  func.func @transform_1(%arg0: i32) -> (i32, i32) {
    %c0_i32 = arith.constant 0 : i32
    %c0_i32_0 = arith.constant 0 : i32
    %c0_i32_1 = arith.constant 0 : i32
    return %c0_i32, %c0_i32_0 : i32, i32
  }
  func.func @transform_2(%arg0: i32) -> (i32, i32) {
    %c0_i32 = arith.constant 0 : i32
    %c0_i32_0 = arith.constant 0 : i32
    %c0_i32_1 = arith.constant 0 : i32
    return %c0_i32, %c0_i32_0 : i32, i32
  }
  func.func @transform_3(%arg0: i32) -> (i32, i32) {
    %c0_i32 = arith.constant 0 : i32
    %c0_i32_0 = arith.constant 0 : i32
    %c0_i32_1 = arith.constant 0 : i32
    return %c0_i32, %c0_i32_0 : i32, i32
  }
  func.func @transform_4(%arg0: i32) -> (i32, i32) {
    %c0_i32 = arith.constant 0 : i32
    %c0_i32_0 = arith.constant 0 : i32
    %c0_i32_1 = arith.constant 0 : i32
    return %c0_i32, %c0_i32_0 : i32, i32
  }
  func.func @transform_5(%arg0: i32) -> (i32, i32) {
    %c0_i32 = arith.constant 0 : i32
    %c0_i32_0 = arith.constant 0 : i32
    %c0_i32_1 = arith.constant 0 : i32
    return %c0_i32, %c0_i32_0 : i32, i32
  }
  func.func @transform_6(%arg0: i32) -> (i32, i32) {
    %c0_i32 = arith.constant 0 : i32
    %c0_i32_0 = arith.constant 0 : i32
    %c0_i32_1 = arith.constant 0 : i32
    return %c0_i32, %c0_i32_0 : i32, i32
  }
  func.func @transform_7(%arg0: i32) -> (i32, i32) {
    %c0_i32 = arith.constant 0 : i32
    %c0_i32_0 = arith.constant 0 : i32
    %c0_i32_1 = arith.constant 0 : i32
    return %c0_i32, %c0_i32_0 : i32, i32
  }
  func.func @transform_8(%arg0: i32) -> (i32, i32) {
    %c0_i32 = arith.constant 0 : i32
    %c0_i32_0 = arith.constant 0 : i32
    %c0_i32_1 = arith.constant 0 : i32
    return %c0_i32, %c0_i32_0 : i32, i32
  }
  func.func @transform_9(%arg0: i32) -> (i32, i32, i32) {
    %c0_i32 = arith.constant 0 : i32
    %c0_i32_0 = arith.constant 0 : i32
    %c0_i32_1 = arith.constant 0 : i32
    return %arg0, %c0_i32, %c0_i32_0 : i32, i32, i32
  }
}

</mosaic_0001>

<llo_original>
// kernel: btadapter_temp.1
$region0: #{btadapter_temp.1}
  #allocation0 [shape = 'u32[]', space=smem, size = 0x4, offset = 0x4, fixed_abs, tag = 'smem constant byte address 0x4 - core index']
  #allocation1 [shape = 'u32[72,128]{1,0:T(1,128)}', space=vmem, size = 0x9000, scoped, tag = 'internal scratch']
  %s0 = inlined_call_operand.vmem [shape: f32[8,8,32], index: 0, kind: input, shape index: {}, may-alias: {0,9}]
  %s1 = inlined_call_operand.vmem [shape: f32[1,32], index: 1, kind: input, shape index: {}]
  %s2 = inlined_call_operand.vmem [shape: f32[1,32], index: 2, kind: input, shape index: {}]
  %s3 = inlined_call_operand.vmem [shape: bf16[32,96], index: 3, kind: input, shape index: {}]
  %s4 = inlined_call_operand.vmem [shape: f32[1,96], index: 4, kind: input, shape index: {}]
  %s5 = inlined_call_operand.vmem [shape: bf16[32,32], index: 5, kind: input, shape index: {}]
  %s6 = inlined_call_operand.vmem [shape: f32[1,32], index: 6, kind: input, shape index: {}]
  %s7 = inlined_call_operand.vmem [shape: bf16[32,32], index: 7, kind: input, shape index: {}]
  %s8 = inlined_call_operand.vmem [shape: f32[1,32], index: 8, kind: input, shape index: {}]
  %s9 = inlined_call_operand.vmem [shape: f32[8,8,32], index: 9, kind: output, shape index: {}, may-alias: {0,9}]
  %s10 = sld [smem:[#allocation0]]
  $region46: #{btadapter_temp.1} parent=0
    _
  %s12 = ssub.s32 1, %s10
  %s13 = scalar_select 0, %s12, %s10
  // Predicated region
  $region2: #{btadapter_temp.1} parent=0 // pred_check
    _
  $region3: #{btadapter_temp.1} parent=0 // pred_check_branch
    %15 = sbr.rel (0) target = $region5
  $region4: #{btadapter_temp.1} parent=0 // pred_region
    _
  $region5: #{btadapter_temp.1} parent=0 // pred_fallthru
    _
  // Predicated region
  $region6: #{btadapter_temp.1} parent=0 // pred_check
    _
  $region7: #{btadapter_temp.1} parent=0 // pred_check_branch
    %17 = sbr.rel (0) target = $region9
  $region8: #{btadapter_temp.1} parent=0 // pred_region
    _
  $region9: #{btadapter_temp.1} parent=0 // pred_fallthru
    _
  // Predicated region
  $region10: #{btadapter_temp.1} parent=0 // pred_check
    _
  $region11: #{btadapter_temp.1} parent=0 // pred_check_branch
    %19 = sbr.rel (0) target = $region13
  $region12: #{btadapter_temp.1} parent=0 // pred_region
    _
  $region13: #{btadapter_temp.1} parent=0 // pred_fallthru
    _
  // Predicated region
  $region14: #{btadapter_temp.1} parent=0 // pred_check
    _
  $region15: #{btadapter_temp.1} parent=0 // pred_check_branch
    %21 = sbr.rel (0) target = $region17
  $region16: #{btadapter_temp.1} parent=0 // pred_region
    _
  $region17: #{btadapter_temp.1} parent=0 // pred_fallthru
    _
  // Predicated region
  $region18: #{btadapter_temp.1} parent=0 // pred_check
    _
  $region19: #{btadapter_temp.1} parent=0 // pred_check_branch
    %23 = sbr.rel (0) target = $region21
  $region20: #{btadapter_temp.1} parent=0 // pred_region
    _
  $region21: #{btadapter_temp.1} parent=0 // pred_fallthru
    _
  // Predicated region
  $region22: #{btadapter_temp.1} parent=0 // pred_check
    _
  $region23: #{btadapter_temp.1} parent=0 // pred_check_branch
    %25 = sbr.rel (0) target = $region25
  $region24: #{btadapter_temp.1} parent=0 // pred_region
    _
  $region25: #{btadapter_temp.1} parent=0 // pred_fallthru
    _
  // Predicated region
  $region26: #{btadapter_temp.1} parent=0 // pred_check
    _
  $region27: #{btadapter_temp.1} parent=0 // pred_check_branch
    %27 = sbr.rel (0) target = $region29
  $region28: #{btadapter_temp.1} parent=0 // pred_region
    _
  $region29: #{btadapter_temp.1} parent=0 // pred_fallthru
    _
  // Predicated region
  $region30: #{btadapter_temp.1} parent=0 // pred_check
    _
  $region31: #{btadapter_temp.1} parent=0 // pred_check_branch
    %29 = sbr.rel (0) target = $region33
  $region32: #{btadapter_temp.1} parent=0 // pred_region
    _
  $region33: #{btadapter_temp.1} parent=0 // pred_fallthru
    _
  // Predicated region
  $region34: #{btadapter_temp.1} parent=0 // pred_check
    _
  $region35: #{btadapter_temp.1} parent=0 // pred_check_branch
    %31 = sbr.rel (0) target = $region37
  $region36: #{btadapter_temp.1} parent=0 // pred_region
    _
  $region37: #{btadapter_temp.1} parent=0 // pred_fallthru
    _
  %v33 = vld [vmem:[%s0] sm:$0xff]
  %v34 = vld [vmem:[%s0 + $0x8] sm:$0xff]
  %v35 = vld [vmem:[%s0 + $0x10] sm:$0xff]
  %v36 = vld [vmem:[%s0 + $0x18] sm:$0xff]
  %v37 = vld [vmem:[%s0 + $0x20] sm:$0xff]
  %v38 = vld [vmem:[%s0 + $0x28] sm:$0xff]
  %v39 = vld [vmem:[%s0 + $0x30] sm:$0xff]
  %v40 = vld [vmem:[%s0 + $0x38] sm:$0xff]
  %vm41 = vcmask 261120
  %v42 = vsel %vm41, %v33, 0.0
  %43 = vadd.xlane.f32.xlu0 %v42
  %v44 = vpop.xlane.xlu0 %43
  %v45 = vsel %vm41, %v34, 0.0
  %46 = vadd.xlane.f32.xlu0 %v45
  %v47 = vpop.xlane.xlu0 %46
  %v48 = vsel %vm41, %v35, 0.0
  %49 = vadd.xlane.f32.xlu0 %v48
  %v50 = vpop.xlane.xlu0 %49
  %v51 = vsel %vm41, %v36, 0.0
  %52 = vadd.xlane.f32.xlu0 %v51
  %v53 = vpop.xlane.xlu0 %52
  %v54 = vsel %vm41, %v37, 0.0
  %55 = vadd.xlane.f32.xlu0 %v54
  %v56 = vpop.xlane.xlu0 %55
  %v57 = vsel %vm41, %v38, 0.0
  %58 = vadd.xlane.f32.xlu0 %v57
  %v59 = vpop.xlane.xlu0 %58
  %v60 = vsel %vm41, %v39, 0.0
  %61 = vadd.xlane.f32.xlu0 %v60
  %v62 = vpop.xlane.xlu0 %61
  %v63 = vsel %vm41, %v40, 0.0
  %64 = vadd.xlane.f32.xlu0 %v63
  %v65 = vpop.xlane.xlu0 %64
  %v66 = vrcp.pop 32.0
  %v67 = vmul.f32 32.0, %v66
  %v68 = vsub.f32 1.0, %v67
  %v69 = vmul.f32 %v66, %v68
  %v70 = vadd.f32 %v66, %v69
  %vm71 = vweird.f32 %v66
  %v72 = vsel %vm71, %v66, %v70
  %v73 = vmul.f32 %v44, %v72
  %v74 = vmul.f32 %v47, %v72
  %v75 = vmul.f32 %v50, %v72
  %v76 = vmul.f32 %v53, %v72
  %v77 = vmul.f32 %v56, %v72
  %v78 = vmul.f32 %v59, %v72
  %v79 = vmul.f32 %v62, %v72
  %v80 = vmul.f32 %v65, %v72
  %v81 = vmul.f32 %v33, %v33
  %v82 = vmul.f32 %v34, %v34
  %v83 = vmul.f32 %v35, %v35
  %v84 = vmul.f32 %v36, %v36
  %v85 = vmul.f32 %v37, %v37
  %v86 = vmul.f32 %v38, %v38
  %v87 = vmul.f32 %v39, %v39
  %v88 = vmul.f32 %v40, %v40
  %v89 = vsel %vm41, %v81, 0.0
  %90 = vadd.xlane.f32.xlu0 %v89
  %v91 = vpop.xlane.xlu0 %90
  %v92 = vsel %vm41, %v82, 0.0
  %93 = vadd.xlane.f32.xlu0 %v92
  %v94 = vpop.xlane.xlu0 %93
  %v95 = vsel %vm41, %v83, 0.0
  %96 = vadd.xlane.f32.xlu0 %v95
  %v97 = vpop.xlane.xlu0 %96
  %v98 = vsel %vm41, %v84, 0.0
  %99 = vadd.xlane.f32.xlu0 %v98
  %v100 = vpop.xlane.xlu0 %99
  %v101 = vsel %vm41, %v85, 0.0
  %102 = vadd.xlane.f32.xlu0 %v101
  %v103 = vpop.xlane.xlu0 %102
  %v104 = vsel %vm41, %v86, 0.0
  %105 = vadd.xlane.f32.xlu0 %v104
  %v106 = vpop.xlane.xlu0 %105
  %v107 = vsel %vm41, %v87, 0.0
  %108 = vadd.xlane.f32.xlu0 %v107
  %v109 = vpop.xlane.xlu0 %108
  %v110 = vsel %vm41, %v88, 0.0
  %111 = vadd.xlane.f32.xlu0 %v110
  %v112 = vpop.xlane.xlu0 %111
  %v113 = vmul.f32 %v91, %v72
  %v114 = vmul.f32 %v94, %v72
  %v115 = vmul.f32 %v97, %v72
  %v116 = vmul.f32 %v100, %v72
  %v117 = vmul.f32 %v103, %v72
  %v118 = vmul.f32 %v106, %v72
  %v119 = vmul.f32 %v109, %v72
  %v120 = vmul.f32 %v112, %v72
  %v121 = vmul.f32 %v73, %v73
  %v122 = vmul.f32 %v74, %v74
  %v123 = vmul.f32 %v75, %v75
  %v124 = vmul.f32 %v76, %v76
  %v125 = vmul.f32 %v77, %v77
  %v126 = vmul.f32 %v78, %v78
  %v127 = vmul.f32 %v79, %v79
  %v128 = vmul.f32 %v80, %v80
  %v129 = vsub.f32 %v113, %v121
  %v130 = vsub.f32 %v114, %v122
  %v131 = vsub.f32 %v115, %v123
  %v132 = vsub.f32 %v116, %v124
  %v133 = vsub.f32 %v117, %v125
  %v134 = vsub.f32 %v118, %v126
  %v135 = vsub.f32 %v119, %v127
  %v136 = vsub.f32 %v120, %v128
  %v137 = vmax.f32 %v129, 0.0
  %v138 = vmax.f32 %v130, 0.0
  %v139 = vmax.f32 %v131, 0.0
  %v140 = vmax.f32 %v132, 0.0
  %v141 = vmax.f32 %v133, 0.0
  %v142 = vmax.f32 %v134, 0.0
  %v143 = vmax.f32 %v135, 0.0
  %v144 = vmax.f32 %v136, 0.0
  %v145 = vsub.f32 %v33, %v73
  %v146 = vsub.f32 %v34, %v74
  %v147 = vsub.f32 %v35, %v75
  %v148 = vsub.f32 %v36, %v76
  %v149 = vsub.f32 %v37, %v77
  %v150 = vsub.f32 %v38, %v78
  %v151 = vsub.f32 %v39, %v79
  %v152 = vsub.f32 %v40, %v80
  %v153 = vadd.f32 %v137, 1e-06
  %v154 = vadd.f32 %v138, 1e-06
  %v155 = vadd.f32 %v139, 1e-06
  %v156 = vadd.f32 %v140, 1e-06
  %v157 = vadd.f32 %v141, 1e-06
  %v158 = vadd.f32 %v142, 1e-06
  %v159 = vadd.f32 %v143, 1e-06
  %v160 = vadd.f32 %v144, 1e-06
  %v161 = vrsqrt.pop %v153
  %v162 = vmul.f32 %v161, %v153
  %v163 = vmul.f32 %v162, %v161
  %v164 = vmul.f32 0.5, %v163
  %v165 = vsub.f32 1.5, %v164
  %v166 = vmul.f32 %v161, %v165
  %vm167 = vweird.f32 %v153
  %vm168 = vweird.f32 %v161
  %vm169 = vmor %vm167, %vm168
  %v170 = vsel %vm169, %v161, %v166
  %v171 = vrsqrt.pop %v154
  %v172 = vmul.f32 %v171, %v154
  %v173 = vmul.f32 %v172, %v171
  %v174 = vmul.f32 0.5, %v173
  %v175 = vsub.f32 1.5, %v174
  %v176 = vmul.f32 %v171, %v175
  %vm177 = vweird.f32 %v154
  %vm178 = vweird.f32 %v171
  %vm179 = vmor %vm177, %vm178
  %v180 = vsel %vm179, %v171, %v176
  %v181 = vrsqrt.pop %v155
  %v182 = vmul.f32 %v181, %v155
  %v183 = vmul.f32 %v182, %v181
  %v184 = vmul.f32 0.5, %v183
  %v185 = vsub.f32 1.5, %v184
  %v186 = vmul.f32 %v181, %v185
  %vm187 = vweird.f32 %v155
  %vm188 = vweird.f32 %v181
  %vm189 = vmor %vm187, %vm188
  %v190 = vsel %vm189, %v181, %v186
  %v191 = vrsqrt.pop %v156
  %v192 = vmul.f32 %v191, %v156
  %v193 = vmul.f32 %v192, %v191
  %v194 = vmul.f32 0.5, %v193
  %v195 = vsub.f32 1.5, %v194
  %v196 = vmul.f32 %v191, %v195
  %vm197 = vweird.f32 %v156
  %vm198 = vweird.f32 %v191
  %vm199 = vmor %vm197, %vm198
  %v200 = vsel %vm199, %v191, %v196
  %v201 = vrsqrt.pop %v157
  %v202 = vmul.f32 %v201, %v157
  %v203 = vmul.f32 %v202, %v201
  %v204 = vmul.f32 0.5, %v203
  %v205 = vsub.f32 1.5, %v204
  %v206 = vmul.f32 %v201, %v205
  %vm207 = vweird.f32 %v157
  %vm208 = vweird.f32 %v201
  %vm209 = vmor %vm207, %vm208
  %v210 = vsel %vm209, %v201, %v206
  %v211 = vrsqrt.pop %v158
  %v212 = vmul.f32 %v211, %v158
  %v213 = vmul.f32 %v212, %v211
  %v214 = vmul.f32 0.5, %v213
  %v215 = vsub.f32 1.5, %v214
  %v216 = vmul.f32 %v211, %v215
  %vm217 = vweird.f32 %v158
  %vm218 = vweird.f32 %v211
  %vm219 = vmor %vm217, %vm218
  %v220 = vsel %vm219, %v211, %v216
  %v221 = vrsqrt.pop %v159
  %v222 = vmul.f32 %v221, %v159
  %v223 = vmul.f32 %v222, %v221
  %v224 = vmul.f32 0.5, %v223
  %v225 = vsub.f32 1.5, %v224
  %v226 = vmul.f32 %v221, %v225
  %vm227 = vweird.f32 %v159
  %vm228 = vweird.f32 %v221
  %vm229 = vmor %vm227, %vm228
  %v230 = vsel %vm229, %v221, %v226
  %v231 = vrsqrt.pop %v160
  %v232 = vmul.f32 %v231, %v160
  %v233 = vmul.f32 %v232, %v231
  %v234 = vmul.f32 0.5, %v233
  %v235 = vsub.f32 1.5, %v234
  %v236 = vmul.f32 %v231, %v235
  %vm237 = vweird.f32 %v160
  %vm238 = vweird.f32 %v231
  %vm239 = vmor %vm237, %vm238
  %v240 = vsel %vm239, %v231, %v236
  %v241 = vmul.f32 %v145, %v170
  %v242 = vmul.f32 %v146, %v180
  %v243 = vmul.f32 %v147, %v190
  %v244 = vmul.f32 %v148, %v200
  %v245 = vmul.f32 %v149, %v210
  %v246 = vmul.f32 %v150, %v220
  %v247 = vmul.f32 %v151, %v230
  %v248 = vmul.f32 %v152, %v240
  %v249 = vld [vmem:[%s1] sm:$0x1]
  %v251 = vperm.slane %v249, 0
  %v253 = vmul.f32 %v241, %v251
  %v254 = vmul.f32 %v242, %v251
  %v255 = vmul.f32 %v243, %v251
  %v256 = vmul.f32 %v244, %v251
  %v257 = vmul.f32 %v245, %v251
  %v258 = vmul.f32 %v246, %v251
  %v259 = vmul.f32 %v247, %v251
  %v260 = vmul.f32 %v248, %v251
  %v261 = vld [vmem:[%s2] sm:$0x1]
  %v263 = vperm.slane %v261, 0
  %v265 = vadd.f32 %v253, %v263
  %v266 = vadd.f32 %v254, %v263
  %v267 = vadd.f32 %v255, %v263
  %v268 = vadd.f32 %v256, %v263
  %v269 = vadd.f32 %v257, %v263
  %v270 = vadd.f32 %v258, %v263
  %v271 = vadd.f32 %v259, %v263
  %v272 = vadd.f32 %v260, %v263
  %v273 = vpack.c.bf16 %v266, %v265
  %v274 = vpack.c.bf16 %v268, %v267
  %v275 = vpack.c.bf16 %v270, %v269
  %v276 = vpack.c.bf16 %v272, %v271
  %v277 = vld [vmem:[%s3] sm:$0xf]
  %v278 = vld [vmem:[%s3 + $0x4] sm:$0xf]
  %v279 = vld [vmem:[%s3 + $0x8] sm:$0xf]
  %v280 = vld [vmem:[%s3 + $0xc] sm:$0xf]
  %v281 = vld [vmem:[%s4] sm:$0x1]
  %v283 = vperm.slane %v281, 0
  %v289 = vunpack.c.l.b16 %v277
  %v290 = vunpack.c.l.b16 %v278
  %v291 = vunpack.c.l.b16 %v279
  %v292 = vunpack.c.l.b16 %v280
  %v293 = vpack.c.b16 %v290, %v289
  %v294 = vpack.c.b16 %v292, %v291
  %v298 = vsel %vm41, %v273, 0
  %v301 = vsel %vm41, %v274, 0
  %v304 = vsel %vm41, %v275, 0
  %v307 = vsel %vm41, %v276, 0
  %309 = vmatpush.bf16.msra.mxu0 0
  %310 = vmatpush.bf16.msra.mxu0 0
  %311 = vmatpush.bf16.msra.mxu0 0
  %312 = vmatpush.bf16.msra.mxu0 0
  %313 = vmatpush.bf16.msra.mxu0 0
  %314 = vmatpush.bf16.msra.mxu0 0
  %315 = vmatpush.bf16.msra.mxu0 %v294
  %316 = vmatpush.bf16.msra.mxu0 %v293
  %317 = vmatmul.bf16.gmra.mxu0 %v298
  %v318 = vpop.f32.mrf.mxu0
  %v319 = vadd.f32 %v283, %v318
  %v320 = vpop.f32.mrf.mxu0
  %v321 = vadd.f32 %v283, %v320
  %322 = vmatmul.bf16.gmra.mxu0 %v301
  %v323 = vpop.f32.mrf.mxu0
  %v324 = vadd.f32 %v283, %v323
  %v325 = vpop.f32.mrf.mxu0
  %v326 = vadd.f32 %v283, %v325
  %327 = vmatmul.bf16.gmra.mxu0 %v304
  %v328 = vpop.f32.mrf.mxu0
  %v329 = vadd.f32 %v283, %v328
  %v330 = vpop.f32.mrf.mxu0
  %v331 = vadd.f32 %v283, %v330
  %332 = vmatmul.bf16.gmra.mxu0 %v307
  %v333 = vpop.f32.mrf.mxu0
  %v334 = vadd.f32 %v283, %v333
  %v335 = vpop.f32.mrf.mxu0
  %v336 = vadd.f32 %v283, %v335
  %337 = vdwg.mxu0
  %346 = vrot.lane.b32.xlu0 %v319, 120
  %v347 = vpop.permute.xlu0 %346
  %348 = vrot.lane.b32.xlu0 %v321, 120
  %v349 = vpop.permute.xlu0 %348
  %350 = vrot.lane.b32.xlu0 %v324, 120
  %v351 = vpop.permute.xlu0 %350
  %352 = vrot.lane.b32.xlu0 %v326, 120
  %v353 = vpop.permute.xlu0 %352
  %354 = vrot.lane.b32.xlu0 %v329, 120
  %v355 = vpop.permute.xlu0 %354
  %356 = vrot.lane.b32.xlu0 %v331, 120
  %v357 = vpop.permute.xlu0 %356
  %358 = vrot.lane.b32.xlu0 %v334, 120
  %v359 = vpop.permute.xlu0 %358
  %360 = vrot.lane.b32.xlu0 %v336, 120
  %v361 = vpop.permute.xlu0 %360
  %370 = vrot.lane.b32.xlu0 %v319, 112
  %v371 = vpop.permute.xlu0 %370
  %372 = vrot.lane.b32.xlu0 %v321, 112
  %v373 = vpop.permute.xlu0 %372
  %374 = vrot.lane.b32.xlu0 %v324, 112
  %v375 = vpop.permute.xlu0 %374
  %376 = vrot.lane.b32.xlu0 %v326, 112
  %v377 = vpop.permute.xlu0 %376
  %378 = vrot.lane.b32.xlu0 %v329, 112
  %v379 = vpop.permute.xlu0 %378
  %380 = vrot.lane.b32.xlu0 %v331, 112
  %v381 = vpop.permute.xlu0 %380
  %382 = vrot.lane.b32.xlu0 %v334, 112
  %v383 = vpop.permute.xlu0 %382
  %384 = vrot.lane.b32.xlu0 %v336, 112
  %v385 = vpop.permute.xlu0 %384
  %394 = vrot.lane.b32.xlu0 %v319, 104
  %v395 = vpop.permute.xlu0 %394
  %396 = vrot.lane.b32.xlu0 %v321, 104
  %v397 = vpop.permute.xlu0 %396
  %398 = vrot.lane.b32.xlu0 %v324, 104
  %v399 = vpop.permute.xlu0 %398
  %400 = vrot.lane.b32.xlu0 %v326, 104
  %v401 = vpop.permute.xlu0 %400
  %402 = vrot.lane.b32.xlu0 %v329, 104
  %v403 = vpop.permute.xlu0 %402
  %404 = vrot.lane.b32.xlu0 %v331, 104
  %v405 = vpop.permute.xlu0 %404
  %406 = vrot.lane.b32.xlu0 %v334, 104
  %v407 = vpop.permute.xlu0 %406
  %408 = vrot.lane.b32.xlu0 %v336, 104
  %v409 = vpop.permute.xlu0 %408
  %v418 = vpack.c.bf16 %v319, %v319
  %v419 = vpack.c.bf16 %v321, %v321
  %v420 = vpack.c.bf16 %v324, %v324
  %v421 = vpack.c.bf16 %v326, %v326
  %v422 = vpack.c.bf16 %v329, %v329
  %v423 = vpack.c.bf16 %v331, %v331
  %v424 = vpack.c.bf16 %v334, %v334
  %v425 = vpack.c.bf16 %v336, %v336
  %v426 = vpack.c.bf16 %v347, %v347
  %v427 = vpack.c.bf16 %v349, %v349
  %v428 = vpack.c.bf16 %v351, %v351
  %v429 = vpack.c.bf16 %v353, %v353
  %v430 = vpack.c.bf16 %v355, %v355
  %v431 = vpack.c.bf16 %v357, %v357
  %v432 = vpack.c.bf16 %v359, %v359
  %v433 = vpack.c.bf16 %v361, %v361
  %v434 = vpack.c.bf16 %v371, %v371
  %v435 = vpack.c.bf16 %v373, %v373
  %v436 = vpack.c.bf16 %v375, %v375
  %v437 = vpack.c.bf16 %v377, %v377
  %v438 = vpack.c.bf16 %v379, %v379
  %v439 = vpack.c.bf16 %v381, %v381
  %v440 = vpack.c.bf16 %v383, %v383
  %v441 = vpack.c.bf16 %v385, %v385
  %v442 = vpack.c.bf16 %v395, %v395
  %v443 = vpack.c.bf16 %v397, %v397
  %v444 = vpack.c.bf16 %v399, %v399
  %v445 = vpack.c.bf16 %v401, %v401
  %v446 = vpack.c.bf16 %v403, %v403
  %v447 = vpack.c.bf16 %v405, %v405
  %v448 = vpack.c.bf16 %v407, %v407
  %v449 = vpack.c.bf16 %v409, %v409
  %v451 = vunpack.c.l.b16 %v418
  %v452 = vpack.c.b16 %v451, %v451
  %453 = vrot.lane.b32.xlu0 %v452, 96
  %v454 = vpop.permute.xlu0 %453
  %vm455 = vcmask 64512
  %v457 = vsel %vm455, %v418, 0
  %v460 = vsel %vm455, %v454, 0
  %462 = vmatpush.bf16.xpose.msra.mxu0 0
  %463 = vmatpush.bf16.xpose.msra.mxu0 0
  %464 = vmatpush.bf16.xpose.msra.mxu0 0
  %465 = vmatpush.bf16.xpose.msra.mxu0 0
  %466 = vmatpush.bf16.xpose.msra.mxu0 0
  %467 = vmatpush.bf16.xpose.msra.mxu0 0
  %468 = vmatpush.bf16.xpose.msra.mxu0 0
  %469 = vmatpush.bf16.xpose.msra.mxu0 %v460
  %470 = vmatmul.bf16.gmra.mxu0 %v457
  %v471 = vpop.f32.mrf.mxu0
  %v472 = vadd.f32 0.0, %v471
  %v473 = vpop.f32.mrf.mxu0
  %474 = vdwg.mxu0
  %v476 = vunpack.c.l.b16 %v419
  %v477 = vpack.c.b16 %v476, %v476
  %478 = vrot.lane.b32.xlu0 %v477, 96
  %v479 = vpop.permute.xlu0 %478
  %v481 = vsel %vm455, %v419, 0
  %v484 = vsel %vm455, %v479, 0
  %486 = vmatpush.bf16.xpose.msra.mxu0 0
  %487 = vmatpush.bf16.xpose.msra.mxu0 0
  %488 = vmatpush.bf16.xpose.msra.mxu0 0
  %489 = vmatpush.bf16.xpose.msra.mxu0 0
  %490 = vmatpush.bf16.xpose.msra.mxu0 0
  %491 = vmatpush.bf16.xpose.msra.mxu0 0
  %492 = vmatpush.bf16.xpose.msra.mxu0 0
  %493 = vmatpush.bf16.xpose.msra.mxu0 %v484
  %494 = vmatmul.bf16.gmra.mxu0 %v481
  %v495 = vpop.f32.mrf.mxu0
  %v496 = vadd.f32 0.0, %v495
  %v497 = vpop.f32.mrf.mxu0
  %498 = vdwg.mxu0
  %v500 = vunpack.c.l.b16 %v420
  %v501 = vpack.c.b16 %v500, %v500
  %502 = vrot.lane.b32.xlu0 %v501, 96
  %v503 = vpop.permute.xlu0 %502
  %v505 = vsel %vm455, %v420, 0
  %v508 = vsel %vm455, %v503, 0
  %510 = vmatpush.bf16.xpose.msra.mxu0 0
  %511 = vmatpush.bf16.xpose.msra.mxu0 0
  %512 = vmatpush.bf16.xpose.msra.mxu0 0
  %513 = vmatpush.bf16.xpose.msra.mxu0 0
  %514 = vmatpush.bf16.xpose.msra.mxu0 0
  %515 = vmatpush.bf16.xpose.msra.mxu0 0
  %516 = vmatpush.bf16.xpose.msra.mxu0 0
  %517 = vmatpush.bf16.xpose.msra.mxu0 %v508
  %518 = vmatmul.bf16.gmra.mxu0 %v505
  %v519 = vpop.f32.mrf.mxu0
  %v520 = vadd.f32 0.0, %v519
  %v521 = vpop.f32.mrf.mxu0
  %522 = vdwg.mxu0
  %v524 = vunpack.c.l.b16 %v421
  %v525 = vpack.c.b16 %v524, %v524
  %526 = vrot.lane.b32.xlu0 %v525, 96
  %v527 = vpop.permute.xlu0 %526
  %v529 = vsel %vm455, %v421, 0
  %v532 = vsel %vm455, %v527, 0
  %534 = vmatpush.bf16.xpose.msra.mxu0 0
  %535 = vmatpush.bf16.xpose.msra.mxu0 0
  %536 = vmatpush.bf16.xpose.msra.mxu0 0
  %537 = vmatpush.bf16.xpose.msra.mxu0 0
  %538 = vmatpush.bf16.xpose.msra.mxu0 0
  %539 = vmatpush.bf16.xpose.msra.mxu0 0
  %540 = vmatpush.bf16.xpose.msra.mxu0 0
  %541 = vmatpush.bf16.xpose.msra.mxu0 %v532
  %542 = vmatmul.bf16.gmra.mxu0 %v529
  %v543 = vpop.f32.mrf.mxu0
  %v544 = vadd.f32 0.0, %v543
  %v545 = vpop.f32.mrf.mxu0
  %546 = vdwg.mxu0
  %v548 = vunpack.c.l.b16 %v422
  %v549 = vpack.c.b16 %v548, %v548
  %550 = vrot.lane.b32.xlu0 %v549, 96
  %v551 = vpop.permute.xlu0 %550
  %v553 = vsel %vm455, %v422, 0
  %v556 = vsel %vm455, %v551, 0
  %558 = vmatpush.bf16.xpose.msra.mxu0 0
  %559 = vmatpush.bf16.xpose.msra.mxu0 0
  %560 = vmatpush.bf16.xpose.msra.mxu0 0
  %561 = vmatpush.bf16.xpose.msra.mxu0 0
  %562 = vmatpush.bf16.xpose.msra.mxu0 0
  %563 = vmatpush.bf16.xpose.msra.mxu0 0
  %564 = vmatpush.bf16.xpose.msra.mxu0 0
  %565 = vmatpush.bf16.xpose.msra.mxu0 %v556
  %566 = vmatmul.bf16.gmra.mxu0 %v553
  %v567 = vpop.f32.mrf.mxu0
  %v568 = vadd.f32 0.0, %v567
  %v569 = vpop.f32.mrf.mxu0
  %570 = vdwg.mxu0
  %v572 = vunpack.c.l.b16 %v423
  %v573 = vpack.c.b16 %v572, %v572
  %574 = vrot.lane.b32.xlu0 %v573, 96
  %v575 = vpop.permute.xlu0 %574
  %v577 = vsel %vm455, %v423, 0
  %v580 = vsel %vm455, %v575, 0
  %582 = vmatpush.bf16.xpose.msra.mxu0 0
  %583 = vmatpush.bf16.xpose.msra.mxu0 0
  %584 = vmatpush.bf16.xpose.msra.mxu0 0
  %585 = vmatpush.bf16.xpose.msra.mxu0 0
  %586 = vmatpush.bf16.xpose.msra.mxu0 0
  %587 = vmatpush.bf16.xpose.msra.mxu0 0
  %588 = vmatpush.bf16.xpose.msra.mxu0 0
  %589 = vmatpush.bf16.xpose.msra.mxu0 %v580
  %590 = vmatmul.bf16.gmra.mxu0 %v577
  %v591 = vpop.f32.mrf.mxu0
  %v592 = vadd.f32 0.0, %v591
  %v593 = vpop.f32.mrf.mxu0
  %594 = vdwg.mxu0
  %v596 = vunpack.c.l.b16 %v424
  %v597 = vpack.c.b16 %v596, %v596
  %598 = vrot.lane.b32.xlu0 %v597, 96
  %v599 = vpop.permute.xlu0 %598
  %v601 = vsel %vm455, %v424, 0
  %v604 = vsel %vm455, %v599, 0
  %606 = vmatpush.bf16.xpose.msra.mxu0 0
  %607 = vmatpush.bf16.xpose.msra.mxu0 0
  %608 = vmatpush.bf16.xpose.msra.mxu0 0
  %609 = vmatpush.bf16.xpose.msra.mxu0 0
  %610 = vmatpush.bf16.xpose.msra.mxu0 0
  %611 = vmatpush.bf16.xpose.msra.mxu0 0
  %612 = vmatpush.bf16.xpose.msra.mxu0 0
  %613 = vmatpush.bf16.xpose.msra.mxu0 %v604
  %614 = vmatmul.bf16.gmra.mxu0 %v601
  %v615 = vpop.f32.mrf.mxu0
  %v616 = vadd.f32 0.0, %v615
  %v617 = vpop.f32.mrf.mxu0
  %618 = vdwg.mxu0
  %v620 = vunpack.c.l.b16 %v425
  %v621 = vpack.c.b16 %v620, %v620
  %622 = vrot.lane.b32.xlu0 %v621, 96
  %v623 = vpop.permute.xlu0 %622
  %v625 = vsel %vm455, %v425, 0
  %v628 = vsel %vm455, %v623, 0
  %630 = vmatpush.bf16.xpose.msra.mxu0 0
  %631 = vmatpush.bf16.xpose.msra.mxu0 0
  %632 = vmatpush.bf16.xpose.msra.mxu0 0
  %633 = vmatpush.bf16.xpose.msra.mxu0 0
  %634 = vmatpush.bf16.xpose.msra.mxu0 0
  %635 = vmatpush.bf16.xpose.msra.mxu0 0
  %636 = vmatpush.bf16.xpose.msra.mxu0 0
  %637 = vmatpush.bf16.xpose.msra.mxu0 %v628
  %638 = vmatmul.bf16.gmra.mxu0 %v625
  %v639 = vpop.f32.mrf.mxu0
  %v640 = vadd.f32 0.0, %v639
  %v641 = vpop.f32.mrf.mxu0
  %642 = vdwg.mxu0
  %v644 = vunpack.c.l.b16 %v426
  %v645 = vpack.c.b16 %v644, %v644
  %646 = vrot.lane.b32.xlu0 %v645, 96
  %v647 = vpop.permute.xlu0 %646
  %v649 = vsel %vm455, %v426, 0
  %v652 = vsel %vm455, %v647, 0
  %654 = vmatpush.bf16.xpose.msra.mxu0 0
  %655 = vmatpush.bf16.xpose.msra.mxu0 0
  %656 = vmatpush.bf16.xpose.msra.mxu0 0
  %657 = vmatpush.bf16.xpose.msra.mxu0 0
  %658 = vmatpush.bf16.xpose.msra.mxu0 0
  %659 = vmatpush.bf16.xpose.msra.mxu0 0
  %660 = vmatpush.bf16.xpose.msra.mxu0 0
  %661 = vmatpush.bf16.xpose.msra.mxu0 %v652
  %662 = vmatmul.bf16.gmra.mxu0 %v649
  %v663 = vpop.f32.mrf.mxu0
  %v664 = vadd.f32 0.0, %v663
  %v665 = vpop.f32.mrf.mxu0
  %666 = vdwg.mxu0
  %v668 = vunpack.c.l.b16 %v427
  %v669 = vpack.c.b16 %v668, %v668
  %670 = vrot.lane.b32.xlu0 %v669, 96
  %v671 = vpop.permute.xlu0 %670
  %v673 = vsel %vm455, %v427, 0
  %v676 = vsel %vm455, %v671, 0
  %678 = vmatpush.bf16.xpose.msra.mxu0 0
  %679 = vmatpush.bf16.xpose.msra.mxu0 0
  %680 = vmatpush.bf16.xpose.msra.mxu0 0
  %681 = vmatpush.bf16.xpose.msra.mxu0 0
  %682 = vmatpush.bf16.xpose.msra.mxu0 0
  %683 = vmatpush.bf16.xpose.msra.mxu0 0
  %684 = vmatpush.bf16.xpose.msra.mxu0 0
  %685 = vmatpush.bf16.xpose.msra.mxu0 %v676
  %686 = vmatmul.bf16.gmra.mxu0 %v673
  %v687 = vpop.f32.mrf.mxu0
  %v688 = vadd.f32 0.0, %v687
  %v689 = vpop.f32.mrf.mxu0
  %690 = vdwg.mxu0
  %v692 = vunpack.c.l.b16 %v428
  %v693 = vpack.c.b16 %v692, %v692
  %694 = vrot.lane.b32.xlu0 %v693, 96
  %v695 = vpop.permute.xlu0 %694
  %v697 = vsel %vm455, %v428, 0
  %v700 = vsel %vm455, %v695, 0
  %702 = vmatpush.bf16.xpose.msra.mxu0 0
  %703 = vmatpush.bf16.xpose.msra.mxu0 0
  %704 = vmatpush.bf16.xpose.msra.mxu0 0
  %705 = vmatpush.bf16.xpose.msra.mxu0 0
  %706 = vmatpush.bf16.xpose.msra.mxu0 0
  %707 = vmatpush.bf16.xpose.msra.mxu0 0
  %708 = vmatpush.bf16.xpose.msra.mxu0 0
  %709 = vmatpush.bf16.xpose.msra.mxu0 %v700
  %710 = vmatmul.bf16.gmra.mxu0 %v697
  %v711 = vpop.f32.mrf.mxu0
  %v712 = vadd.f32 0.0, %v711
  %v713 = vpop.f32.mrf.mxu0
  %714 = vdwg.mxu0
  %v716 = vunpack.c.l.b16 %v429
  %v717 = vpack.c.b16 %v716, %v716
  %718 = vrot.lane.b32.xlu0 %v717, 96
  %v719 = vpop.permute.xlu0 %718
  %v721 = vsel %vm455, %v429, 0
  %v724 = vsel %vm455, %v719, 0
  %726 = vmatpush.bf16.xpose.msra.mxu0 0
  %727 = vmatpush.bf16.xpose.msra.mxu0 0
  %728 = vmatpush.bf16.xpose.msra.mxu0 0
  %729 = vmatpush.bf16.xpose.msra.mxu0 0
  %730 = vmatpush.bf16.xpose.msra.mxu0 0
  %731 = vmatpush.bf16.xpose.msra.mxu0 0
  %732 = vmatpush.bf16.xpose.msra.mxu0 0
  %733 = vmatpush.bf16.xpose.msra.mxu0 %v724
  %734 = vmatmul.bf16.gmra.mxu0 %v721
  %v735 = vpop.f32.mrf.mxu0
  %v736 = vadd.f32 0.0, %v735
  %v737 = vpop.f32.mrf.mxu0
  %738 = vdwg.mxu0
  %v740 = vunpack.c.l.b16 %v430
  %v741 = vpack.c.b16 %v740, %v740
  %742 = vrot.lane.b32.xlu0 %v741, 96
  %v743 = vpop.permute.xlu0 %742
  %v745 = vsel %vm455, %v430, 0
  %v748 = vsel %vm455, %v743, 0
  %750 = vmatpush.bf16.xpose.msra.mxu0 0
  %751 = vmatpush.bf16.xpose.msra.mxu0 0
  %752 = vmatpush.bf16.xpose.msra.mxu0 0
  %753 = vmatpush.bf16.xpose.msra.mxu0 0
  %754 = vmatpush.bf16.xpose.msra.mxu0 0
  %755 = vmatpush.bf16.xpose.msra.mxu0 0
  %756 = vmatpush.bf16.xpose.msra.mxu0 0
  %757 = vmatpush.bf16.xpose.msra.mxu0 %v748
  %758 = vmatmul.bf16.gmra.mxu0 %v745
  %v759 = vpop.f32.mrf.mxu0
  %v760 = vadd.f32 0.0, %v759
  %v761 = vpop.f32.mrf.mxu0
  %762 = vdwg.mxu0
  %v764 = vunpack.c.l.b16 %v431
  %v765 = vpack.c.b16 %v764, %v764
  %766 = vrot.lane.b32.xlu0 %v765, 96
  %v767 = vpop.permute.xlu0 %766
  %v769 = vsel %vm455, %v431, 0
  %v772 = vsel %vm455, %v767, 0
  %774 = vmatpush.bf16.xpose.msra.mxu0 0
  %775 = vmatpush.bf16.xpose.msra.mxu0 0
  %776 = vmatpush.bf16.xpose.msra.mxu0 0
  %777 = vmatpush.bf16.xpose.msra.mxu0 0
  %778 = vmatpush.bf16.xpose.msra.mxu0 0
  %779 = vmatpush.bf16.xpose.msra.mxu0 0
  %780 = vmatpush.bf16.xpose.msra.mxu0 0
  %781 = vmatpush.bf16.xpose.msra.mxu0 %v772
  %782 = vmatmul.bf16.gmra.mxu0 %v769
  %v783 = vpop.f32.mrf.mxu0
  %v784 = vadd.f32 0.0, %v783
  %v785 = vpop.f32.mrf.mxu0
  %786 = vdwg.mxu0
  %v788 = vunpack.c.l.b16 %v432
  %v789 = vpack.c.b16 %v788, %v788
  %790 = vrot.lane.b32.xlu0 %v789, 96
  %v791 = vpop.permute.xlu0 %790
  %v793 = vsel %vm455, %v432, 0
  %v796 = vsel %vm455, %v791, 0
  %798 = vmatpush.bf16.xpose.msra.mxu0 0
  %799 = vmatpush.bf16.xpose.msra.mxu0 0
  %800 = vmatpush.bf16.xpose.msra.mxu0 0
  %801 = vmatpush.bf16.xpose.msra.mxu0 0
  %802 = vmatpush.bf16.xpose.msra.mxu0 0
  %803 = vmatpush.bf16.xpose.msra.mxu0 0
  %804 = vmatpush.bf16.xpose.msra.mxu0 0
  %805 = vmatpush.bf16.xpose.msra.mxu0 %v796
  %806 = vmatmul.bf16.gmra.mxu0 %v793
  %v807 = vpop.f32.mrf.mxu0
  %v808 = vadd.f32 0.0, %v807
  %v809 = vpop.f32.mrf.mxu0
  %810 = vdwg.mxu0
  %v812 = vunpack.c.l.b16 %v433
  %v813 = vpack.c.b16 %v812, %v812
  %814 = vrot.lane.b32.xlu0 %v813, 96
  %v815 = vpop.permute.xlu0 %814
  %v817 = vsel %vm455, %v433, 0
  %v820 = vsel %vm455, %v815, 0
  %822 = vmatpush.bf16.xpose.msra.mxu0 0
  %823 = vmatpush.bf16.xpose.msra.mxu0 0
  %824 = vmatpush.bf16.xpose.msra.mxu0 0
  %825 = vmatpush.bf16.xpose.msra.mxu0 0
  %826 = vmatpush.bf16.xpose.msra.mxu0 0
  %827 = vmatpush.bf16.xpose.msra.mxu0 0
  %828 = vmatpush.bf16.xpose.msra.mxu0 0
  %829 = vmatpush.bf16.xpose.msra.mxu0 %v820
  %830 = vmatmul.bf16.gmra.mxu0 %v817
  %v831 = vpop.f32.mrf.mxu0
  %v832 = vadd.f32 0.0, %v831
  %v833 = vpop.f32.mrf.mxu0
  %834 = vdwg.mxu0
  %v836 = vunpack.c.l.b16 %v434
  %v837 = vpack.c.b16 %v836, %v836
  %838 = vrot.lane.b32.xlu0 %v837, 96
  %v839 = vpop.permute.xlu0 %838
  %v841 = vsel %vm455, %v434, 0
  %v844 = vsel %vm455, %v839, 0
  %846 = vmatpush.bf16.xpose.msra.mxu0 0
  %847 = vmatpush.bf16.xpose.msra.mxu0 0
  %848 = vmatpush.bf16.xpose.msra.mxu0 0
  %849 = vmatpush.bf16.xpose.msra.mxu0 0
  %850 = vmatpush.bf16.xpose.msra.mxu0 0
  %851 = vmatpush.bf16.xpose.msra.mxu0 0
  %852 = vmatpush.bf16.xpose.msra.mxu0 0
  %853 = vmatpush.bf16.xpose.msra.mxu0 %v844
  %854 = vmatmul.bf16.gmra.mxu0 %v841
  %v855 = vpop.f32.mrf.mxu0
  %v856 = vadd.f32 0.0, %v855
  %v857 = vpop.f32.mrf.mxu0
  %858 = vdwg.mxu0
  %v860 = vunpack.c.l.b16 %v435
  %v861 = vpack.c.b16 %v860, %v860
  %862 = vrot.lane.b32.xlu0 %v861, 96
  %v863 = vpop.permute.xlu0 %862
  %v865 = vsel %vm455, %v435, 0
  %v868 = vsel %vm455, %v863, 0
  %870 = vmatpush.bf16.xpose.msra.mxu0 0
  %871 = vmatpush.bf16.xpose.msra.mxu0 0
  %872 = vmatpush.bf16.xpose.msra.mxu0 0
  %873 = vmatpush.bf16.xpose.msra.mxu0 0
  %874 = vmatpush.bf16.xpose.msra.mxu0 0
  %875 = vmatpush.bf16.xpose.msra.mxu0 0
  %876 = vmatpush.bf16.xpose.msra.mxu0 0
  %877 = vmatpush.bf16.xpose.msra.mxu0 %v868
  %878 = vmatmul.bf16.gmra.mxu0 %v865
  %v879 = vpop.f32.mrf.mxu0
  %v880 = vadd.f32 0.0, %v879
  %v881 = vpop.f32.mrf.mxu0
  %882 = vdwg.mxu0
  %v884 = vunpack.c.l.b16 %v436
  %v885 = vpack.c.b16 %v884, %v884
  %886 = vrot.lane.b32.xlu0 %v885, 96
  %v887 = vpop.permute.xlu0 %886
  %v889 = vsel %vm455, %v436, 0
  %v892 = vsel %vm455, %v887, 0
  %894 = vmatpush.bf16.xpose.msra.mxu0 0
  %895 = vmatpush.bf16.xpose.msra.mxu0 0
  %896 = vmatpush.bf16.xpose.msra.mxu0 0
  %897 = vmatpush.bf16.xpose.msra.mxu0 0
  %898 = vmatpush.bf16.xpose.msra.mxu0 0
  %899 = vmatpush.bf16.xpose.msra.mxu0 0
  %900 = vmatpush.bf16.xpose.msra.mxu0 0
  %901 = vmatpush.bf16.xpose.msra.mxu0 %v892
  %902 = vmatmul.bf16.gmra.mxu0 %v889
  %v903 = vpop.f32.mrf.mxu0
  %v904 = vadd.f32 0.0, %v903
  %v905 = vpop.f32.mrf.mxu0
  %906 = vdwg.mxu0
  %v908 = vunpack.c.l.b16 %v437
  %v909 = vpack.c.b16 %v908, %v908
  %910 = vrot.lane.b32.xlu0 %v909, 96
  %v911 = vpop.permute.xlu0 %910
  %v913 = vsel %vm455, %v437, 0
  %v916 = vsel %vm455, %v911, 0
  %918 = vmatpush.bf16.xpose.msra.mxu0 0
  %919 = vmatpush.bf16.xpose.msra.mxu0 0
  %920 = vmatpush.bf16.xpose.msra.mxu0 0
  %921 = vmatpush.bf16.xpose.msra.mxu0 0
  %922 = vmatpush.bf16.xpose.msra.mxu0 0
  %923 = vmatpush.bf16.xpose.msra.mxu0 0
  %924 = vmatpush.bf16.xpose.msra.mxu0 0
  %925 = vmatpush.bf16.xpose.msra.mxu0 %v916
  %926 = vmatmul.bf16.gmra.mxu0 %v913
  %v927 = vpop.f32.mrf.mxu0
  %v928 = vadd.f32 0.0, %v927
  %v929 = vpop.f32.mrf.mxu0
  %930 = vdwg.mxu0
  %v932 = vunpack.c.l.b16 %v438
  %v933 = vpack.c.b16 %v932, %v932
  %934 = vrot.lane.b32.xlu0 %v933, 96
  %v935 = vpop.permute.xlu0 %934
  %v937 = vsel %vm455, %v438, 0
  %v940 = vsel %vm455, %v935, 0
  %942 = vmatpush.bf16.xpose.msra.mxu0 0
  %943 = vmatpush.bf16.xpose.msra.mxu0 0
  %944 = vmatpush.bf16.xpose.msra.mxu0 0
  %945 = vmatpush.bf16.xpose.msra.mxu0 0
  %946 = vmatpush.bf16.xpose.msra.mxu0 0
  %947 = vmatpush.bf16.xpose.msra.mxu0 0
  %948 = vmatpush.bf16.xpose.msra.mxu0 0
  %949 = vmatpush.bf16.xpose.msra.mxu0 %v940
  %950 = vmatmul.bf16.gmra.mxu0 %v937
  %v951 = vpop.f32.mrf.mxu0
  %v952 = vadd.f32 0.0, %v951
  %v953 = vpop.f32.mrf.mxu0
  %954 = vdwg.mxu0
  %v956 = vunpack.c.l.b16 %v439
  %v957 = vpack.c.b16 %v956, %v956
  %958 = vrot.lane.b32.xlu0 %v957, 96
  %v959 = vpop.permute.xlu0 %958
  %v961 = vsel %vm455, %v439, 0
  %v964 = vsel %vm455, %v959, 0
  %966 = vmatpush.bf16.xpose.msra.mxu0 0
  %967 = vmatpush.bf16.xpose.msra.mxu0 0
  %968 = vmatpush.bf16.xpose.msra.mxu0 0
  %969 = vmatpush.bf16.xpose.msra.mxu0 0
  %970 = vmatpush.bf16.xpose.msra.mxu0 0
  %971 = vmatpush.bf16.xpose.msra.mxu0 0
  %972 = vmatpush.bf16.xpose.msra.mxu0 0
  %973 = vmatpush.bf16.xpose.msra.mxu0 %v964
  %974 = vmatmul.bf16.gmra.mxu0 %v961
  %v975 = vpop.f32.mrf.mxu0
  %v976 = vadd.f32 0.0, %v975
  %v977 = vpop.f32.mrf.mxu0
  %978 = vdwg.mxu0
  %v980 = vunpack.c.l.b16 %v440
  %v981 = vpack.c.b16 %v980, %v980
  %982 = vrot.lane.b32.xlu0 %v981, 96
  %v983 = vpop.permute.xlu0 %982
  %v985 = vsel %vm455, %v440, 0
  %v988 = vsel %vm455, %v983, 0
  %990 = vmatpush.bf16.xpose.msra.mxu0 0
  %991 = vmatpush.bf16.xpose.msra.mxu0 0
  %992 = vmatpush.bf16.xpose.msra.mxu0 0
  %993 = vmatpush.bf16.xpose.msra.mxu0 0
  %994 = vmatpush.bf16.xpose.msra.mxu0 0
  %995 = vmatpush.bf16.xpose.msra.mxu0 0
  %996 = vmatpush.bf16.xpose.msra.mxu0 0
  %997 = vmatpush.bf16.xpose.msra.mxu0 %v988
  %998 = vmatmul.bf16.gmra.mxu0 %v985
  %v999 = vpop.f32.mrf.mxu0
  %v1000 = vadd.f32 0.0, %v999
  %v1001 = vpop.f32.mrf.mxu0
  %1002 = vdwg.mxu0
  %v1004 = vunpack.c.l.b16 %v441
  %v1005 = vpack.c.b16 %v1004, %v1004
  %1006 = vrot.lane.b32.xlu0 %v1005, 96
  %v1007 = vpop.permute.xlu0 %1006
  %v1009 = vsel %vm455, %v441, 0
  %v1012 = vsel %vm455, %v1007, 0
  %1014 = vmatpush.bf16.xpose.msra.mxu0 0
  %1015 = vmatpush.bf16.xpose.msra.mxu0 0
  %1016 = vmatpush.bf16.xpose.msra.mxu0 0
  %1017 = vmatpush.bf16.xpose.msra.mxu0 0
  %1018 = vmatpush.bf16.xpose.msra.mxu0 0
  %1019 = vmatpush.bf16.xpose.msra.mxu0 0
  %1020 = vmatpush.bf16.xpose.msra.mxu0 0
  %1021 = vmatpush.bf16.xpose.msra.mxu0 %v1012
  %1022 = vmatmul.bf16.gmra.mxu0 %v1009
  %v1023 = vpop.f32.mrf.mxu0
  %v1024 = vadd.f32 0.0, %v1023
  %v1025 = vpop.f32.mrf.mxu0
  %1026 = vdwg.mxu0
  %v1028 = vunpack.c.l.b16 %v442
  %v1029 = vpack.c.b16 %v1028, %v1028
  %1030 = vrot.lane.b32.xlu0 %v1029, 96
  %v1031 = vpop.permute.xlu0 %1030
  %v1033 = vsel %vm455, %v442, 0
  %v1036 = vsel %vm455, %v1031, 0
  %1038 = vmatpush.bf16.xpose.msra.mxu0 0
  %1039 = vmatpush.bf16.xpose.msra.mxu0 0
  %1040 = vmatpush.bf16.xpose.msra.mxu0 0
  %1041 = vmatpush.bf16.xpose.msra.mxu0 0
  %1042 = vmatpush.bf16.xpose.msra.mxu0 0
  %1043 = vmatpush.bf16.xpose.msra.mxu0 0
  %1044 = vmatpush.bf16.xpose.msra.mxu0 0
  %1045 = vmatpush.bf16.xpose.msra.mxu0 %v1036
  %1046 = vmatmul.bf16.gmra.mxu0 %v1033
  %v1047 = vpop.f32.mrf.mxu0
  %v1048 = vadd.f32 0.0, %v1047
  %v1049 = vpop.f32.mrf.mxu0
  %1050 = vdwg.mxu0
  %v1052 = vunpack.c.l.b16 %v443
  %v1053 = vpack.c.b16 %v1052, %v1052
  %1054 = vrot.lane.b32.xlu0 %v1053, 96
  %v1055 = vpop.permute.xlu0 %1054
  %v1057 = vsel %vm455, %v443, 0
  %v1060 = vsel %vm455, %v1055, 0
  %1062 = vmatpush.bf16.xpose.msra.mxu0 0
  %1063 = vmatpush.bf16.xpose.msra.mxu0 0
  %1064 = vmatpush.bf16.xpose.msra.mxu0 0
  %1065 = vmatpush.bf16.xpose.msra.mxu0 0
  %1066 = vmatpush.bf16.xpose.msra.mxu0 0
  %1067 = vmatpush.bf16.xpose.msra.mxu0 0
  %1068 = vmatpush.bf16.xpose.msra.mxu0 0
  %1069 = vmatpush.bf16.xpose.msra.mxu0 %v1060
  %1070 = vmatmul.bf16.gmra.mxu0 %v1057
  %v1071 = vpop.f32.mrf.mxu0
  %v1072 = vadd.f32 0.0, %v1071
  %v1073 = vpop.f32.mrf.mxu0
  %1074 = vdwg.mxu0
  %v1076 = vunpack.c.l.b16 %v444
  %v1077 = vpack.c.b16 %v1076, %v1076
  %1078 = vrot.lane.b32.xlu0 %v1077, 96
  %v1079 = vpop.permute.xlu0 %1078
  %v1081 = vsel %vm455, %v444, 0
  %v1084 = vsel %vm455, %v1079, 0
  %1086 = vmatpush.bf16.xpose.msra.mxu0 0
  %1087 = vmatpush.bf16.xpose.msra.mxu0 0
  %1088 = vmatpush.bf16.xpose.msra.mxu0 0
  %1089 = vmatpush.bf16.xpose.msra.mxu0 0
  %1090 = vmatpush.bf16.xpose.msra.mxu0 0
  %1091 = vmatpush.bf16.xpose.msra.mxu0 0
  %1092 = vmatpush.bf16.xpose.msra.mxu0 0
  %1093 = vmatpush.bf16.xpose.msra.mxu0 %v1084
  %1094 = vmatmul.bf16.gmra.mxu0 %v1081
  %v1095 = vpop.f32.mrf.mxu0
  %v1096 = vadd.f32 0.0, %v1095
  %v1097 = vpop.f32.mrf.mxu0
  %1098 = vdwg.mxu0
  %v1100 = vunpack.c.l.b16 %v445
  %v1101 = vpack.c.b16 %v1100, %v1100
  %1102 = vrot.lane.b32.xlu0 %v1101, 96
  %v1103 = vpop.permute.xlu0 %1102
  %v1105 = vsel %vm455, %v445, 0
  %v1108 = vsel %vm455, %v1103, 0
  %1110 = vmatpush.bf16.xpose.msra.mxu0 0
  %1111 = vmatpush.bf16.xpose.msra.mxu0 0
  %1112 = vmatpush.bf16.xpose.msra.mxu0 0
  %1113 = vmatpush.bf16.xpose.msra.mxu0 0
  %1114 = vmatpush.bf16.xpose.msra.mxu0 0
  %1115 = vmatpush.bf16.xpose.msra.mxu0 0
  %1116 = vmatpush.bf16.xpose.msra.mxu0 0
  %1117 = vmatpush.bf16.xpose.msra.mxu0 %v1108
  %1118 = vmatmul.bf16.gmra.mxu0 %v1105
  %v1119 = vpop.f32.mrf.mxu0
  %v1120 = vadd.f32 0.0, %v1119
  %v1121 = vpop.f32.mrf.mxu0
  %1122 = vdwg.mxu0
  %v1124 = vunpack.c.l.b16 %v446
  %v1125 = vpack.c.b16 %v1124, %v1124
  %1126 = vrot.lane.b32.xlu0 %v1125, 96
  %v1127 = vpop.permute.xlu0 %1126
  %v1129 = vsel %vm455, %v446, 0
  %v1132 = vsel %vm455, %v1127, 0
  %1134 = vmatpush.bf16.xpose.msra.mxu0 0
  %1135 = vmatpush.bf16.xpose.msra.mxu0 0
  %1136 = vmatpush.bf16.xpose.msra.mxu0 0
  %1137 = vmatpush.bf16.xpose.msra.mxu0 0
  %1138 = vmatpush.bf16.xpose.msra.mxu0 0
  %1139 = vmatpush.bf16.xpose.msra.mxu0 0
  %1140 = vmatpush.bf16.xpose.msra.mxu0 0
  %1141 = vmatpush.bf16.xpose.msra.mxu0 %v1132
  %1142 = vmatmul.bf16.gmra.mxu0 %v1129
  %v1143 = vpop.f32.mrf.mxu0
  %v1144 = vadd.f32 0.0, %v1143
  %v1145 = vpop.f32.mrf.mxu0
  %1146 = vdwg.mxu0
  %v1148 = vunpack.c.l.b16 %v447
  %v1149 = vpack.c.b16 %v1148, %v1148
  %1150 = vrot.lane.b32.xlu0 %v1149, 96
  %v1151 = vpop.permute.xlu0 %1150
  %v1153 = vsel %vm455, %v447, 0
  %v1156 = vsel %vm455, %v1151, 0
  %1158 = vmatpush.bf16.xpose.msra.mxu0 0
  %1159 = vmatpush.bf16.xpose.msra.mxu0 0
  %1160 = vmatpush.bf16.xpose.msra.mxu0 0
  %1161 = vmatpush.bf16.xpose.msra.mxu0 0
  %1162 = vmatpush.bf16.xpose.msra.mxu0 0
  %1163 = vmatpush.bf16.xpose.msra.mxu0 0
  %1164 = vmatpush.bf16.xpose.msra.mxu0 0
  %1165 = vmatpush.bf16.xpose.msra.mxu0 %v1156
  %1166 = vmatmul.bf16.gmra.mxu0 %v1153
  %v1167 = vpop.f32.mrf.mxu0
  %v1168 = vadd.f32 0.0, %v1167
  %v1169 = vpop.f32.mrf.mxu0
  %1170 = vdwg.mxu0
  %v1172 = vunpack.c.l.b16 %v448
  %v1173 = vpack.c.b16 %v1172, %v1172
  %1174 = vrot.lane.b32.xlu0 %v1173, 96
  %v1175 = vpop.permute.xlu0 %1174
  %v1177 = vsel %vm455, %v448, 0
  %v1180 = vsel %vm455, %v1175, 0
  %1182 = vmatpush.bf16.xpose.msra.mxu0 0
  %1183 = vmatpush.bf16.xpose.msra.mxu0 0
  %1184 = vmatpush.bf16.xpose.msra.mxu0 0
  %1185 = vmatpush.bf16.xpose.msra.mxu0 0
  %1186 = vmatpush.bf16.xpose.msra.mxu0 0
  %1187 = vmatpush.bf16.xpose.msra.mxu0 0
  %1188 = vmatpush.bf16.xpose.msra.mxu0 0
  %1189 = vmatpush.bf16.xpose.msra.mxu0 %v1180
  %1190 = vmatmul.bf16.gmra.mxu0 %v1177
  %v1191 = vpop.f32.mrf.mxu0
  %v1192 = vadd.f32 0.0, %v1191
  %v1193 = vpop.f32.mrf.mxu0
  %1194 = vdwg.mxu0
  %v1196 = vunpack.c.l.b16 %v449
  %v1197 = vpack.c.b16 %v1196, %v1196
  %1198 = vrot.lane.b32.xlu0 %v1197, 96
  %v1199 = vpop.permute.xlu0 %1198
  %v1201 = vsel %vm455, %v449, 0
  %v1204 = vsel %vm455, %v1199, 0
  %1206 = vmatpush.bf16.xpose.msra.mxu0 0
  %1207 = vmatpush.bf16.xpose.msra.mxu0 0
  %1208 = vmatpush.bf16.xpose.msra.mxu0 0
  %1209 = vmatpush.bf16.xpose.msra.mxu0 0
  %1210 = vmatpush.bf16.xpose.msra.mxu0 0
  %1211 = vmatpush.bf16.xpose.msra.mxu0 0
  %1212 = vmatpush.bf16.xpose.msra.mxu0 0
  %1213 = vmatpush.bf16.xpose.msra.mxu0 %v1204
  %1214 = vmatmul.bf16.gmra.mxu0 %v1201
  %v1215 = vpop.f32.mrf.mxu0
  %v1216 = vadd.f32 0.0, %v1215
  %v1217 = vpop.f32.mrf.mxu0
  %1218 = vdwg.mxu0
  %v1219 = vsel %vm455, %v472, -inf
  %1220 = vmax.xlane.f32.xlu0 %v1219
  %v1221 = vpop.xlane.xlu0 %1220
  %v1222 = vsel %vm455, %v496, -inf
  %1223 = vmax.xlane.f32.xlu0 %v1222
  %v1224 = vpop.xlane.xlu0 %1223
  %v1225 = vsel %vm455, %v520, -inf
  %1226 = vmax.xlane.f32.xlu0 %v1225
  %v1227 = vpop.xlane.xlu0 %1226
  %v1228 = vsel %vm455, %v544, -inf
  %1229 = vmax.xlane.f32.xlu0 %v1228
  %v1230 = vpop.xlane.xlu0 %1229
  %v1231 = vsel %vm455, %v568, -inf
  %1232 = vmax.xlane.f32.xlu0 %v1231
  %v1233 = vpop.xlane.xlu0 %1232
  %v1234 = vsel %vm455, %v592, -inf
  %1235 = vmax.xlane.f32.xlu0 %v1234
  %v1236 = vpop.xlane.xlu0 %1235
  %v1237 = vsel %vm455, %v616, -inf
  %1238 = vmax.xlane.f32.xlu0 %v1237
  %v1239 = vpop.xlane.xlu0 %1238
  %v1240 = vsel %vm455, %v640, -inf
  %1241 = vmax.xlane.f32.xlu0 %v1240
  %v1242 = vpop.xlane.xlu0 %1241
  %v1243 = vsel %vm455, %v664, -inf
  %1244 = vmax.xlane.f32.xlu0 %v1243
  %v1245 = vpop.xlane.xlu0 %1244
  %v1246 = vsel %vm455, %v688, -inf
  %1247 = vmax.xlane.f32.xlu0 %v1246
  %v1248 = vpop.xlane.xlu0 %1247
  %v1249 = vsel %vm455, %v712, -inf
  %1250 = vmax.xlane.f32.xlu0 %v1249
  %v1251 = vpop.xlane.xlu0 %1250
  %v1252 = vsel %vm455, %v736, -inf
  %1253 = vmax.xlane.f32.xlu0 %v1252
  %v1254 = vpop.xlane.xlu0 %1253
  %v1255 = vsel %vm455, %v760, -inf
  %1256 = vmax.xlane.f32.xlu0 %v1255
  %v1257 = vpop.xlane.xlu0 %1256
  %v1258 = vsel %vm455, %v784, -inf
  %1259 = vmax.xlane.f32.xlu0 %v1258
  %v1260 = vpop.xlane.xlu0 %1259
  %v1261 = vsel %vm455, %v808, -inf
  %1262 = vmax.xlane.f32.xlu0 %v1261
  %v1263 = vpop.xlane.xlu0 %1262
  %v1264 = vsel %vm455, %v832, -inf
  %1265 = vmax.xlane.f32.xlu0 %v1264
  %v1266 = vpop.xlane.xlu0 %1265
  %v1267 = vsel %vm455, %v856, -inf
  %1268 = vmax.xlane.f32.xlu0 %v1267
  %v1269 = vpop.xlane.xlu0 %1268
  %v1270 = vsel %vm455, %v880, -inf
  %1271 = vmax.xlane.f32.xlu0 %v1270
  %v1272 = vpop.xlane.xlu0 %1271
  %v1273 = vsel %vm455, %v904, -inf
  %1274 = vmax.xlane.f32.xlu0 %v1273
  %v1275 = vpop.xlane.xlu0 %1274
  %v1276 = vsel %vm455, %v928, -inf
  %1277 = vmax.xlane.f32.xlu0 %v1276
  %v1278 = vpop.xlane.xlu0 %1277
  %v1279 = vsel %vm455, %v952, -inf
  %1280 = vmax.xlane.f32.xlu0 %v1279
  %v1281 = vpop.xlane.xlu0 %1280
  %v1282 = vsel %vm455, %v976, -inf
  %1283 = vmax.xlane.f32.xlu0 %v1282
  %v1284 = vpop.xlane.xlu0 %1283
  %v1285 = vsel %vm455, %v1000, -inf
  %1286 = vmax.xlane.f32.xlu0 %v1285
  %v1287 = vpop.xlane.xlu0 %1286
  %v1288 = vsel %vm455, %v1024, -inf
  %1289 = vmax.xlane.f32.xlu0 %v1288
  %v1290 = vpop.xlane.xlu0 %1289
  %v1291 = vsel %vm455, %v1048, -inf
  %1292 = vmax.xlane.f32.xlu0 %v1291
  %v1293 = vpop.xlane.xlu0 %1292
  %v1294 = vsel %vm455, %v1072, -inf
  %1295 = vmax.xlane.f32.xlu0 %v1294
  %v1296 = vpop.xlane.xlu0 %1295
  %v1297 = vsel %vm455, %v1096, -inf
  %1298 = vmax.xlane.f32.xlu0 %v1297
  %v1299 = vpop.xlane.xlu0 %1298
  %v1300 = vsel %vm455, %v1120, -inf
  %1301 = vmax.xlane.f32.xlu0 %v1300
  %v1302 = vpop.xlane.xlu0 %1301
  %v1303 = vsel %vm455, %v1144, -inf
  %1304 = vmax.xlane.f32.xlu0 %v1303
  %v1305 = vpop.xlane.xlu0 %1304
  %v1306 = vsel %vm455, %v1168, -inf
  %1307 = vmax.xlane.f32.xlu0 %v1306
  %v1308 = vpop.xlane.xlu0 %1307
  %v1309 = vsel %vm455, %v1192, -inf
  %1310 = vmax.xlane.f32.xlu0 %v1309
  %v1311 = vpop.xlane.xlu0 %1310
  %v1312 = vsel %vm455, %v1216, -inf
  %1313 = vmax.xlane.f32.xlu0 %v1312
  %v1314 = vpop.xlane.xlu0 %1313
  %v1315 = vsub.f32 %v472, %v1221
  %v1316 = vsub.f32 %v496, %v1224
  %v1317 = vsub.f32 %v520, %v1227
  %v1318 = vsub.f32 %v544, %v1230
  %v1319 = vsub.f32 %v568, %v1233
  %v1320 = vsub.f32 %v592, %v1236
  %v1321 = vsub.f32 %v616, %v1239
  %v1322 = vsub.f32 %v640, %v1242
  %v1323 = vsub.f32 %v664, %v1245
  %v1324 = vsub.f32 %v688, %v1248
  %v1325 = vsub.f32 %v712, %v1251
  %v1326 = vsub.f32 %v736, %v1254
  %v1327 = vsub.f32 %v760, %v1257
  %v1328 = vsub.f32 %v784, %v1260
  %v1329 = vsub.f32 %v808, %v1263
  %v1330 = vsub.f32 %v832, %v1266
  %v1331 = vsub.f32 %v856, %v1269
  %v1332 = vsub.f32 %v880, %v1272
  %v1333 = vsub.f32 %v904, %v1275
  %v1334 = vsub.f32 %v928, %v1278
  %v1335 = vsub.f32 %v952, %v1281
  %v1336 = vsub.f32 %v976, %v1284
  %v1337 = vsub.f32 %v1000, %v1287
  %v1338 = vsub.f32 %v1024, %v1290
  %v1339 = vsub.f32 %v1048, %v1293
  %v1340 = vsub.f32 %v1072, %v1296
  %v1341 = vsub.f32 %v1096, %v1299
  %v1342 = vsub.f32 %v1120, %v1302
  %v1343 = vsub.f32 %v1144, %v1305
  %v1344 = vsub.f32 %v1168, %v1308
  %v1345 = vsub.f32 %v1192, %v1311
  %v1346 = vsub.f32 %v1216, %v1314
  %v1347 = vmul.f32 %v1315, 1.442695
  %v1348 = vpow.pop %v1347
  %v1349 = vmul.f32 %v1316, 1.442695
  %v1350 = vpow.pop %v1349
  %v1351 = vmul.f32 %v1317, 1.442695
  %v1352 = vpow.pop %v1351
  %v1353 = vmul.f32 %v1318, 1.442695
  %v1354 = vpow.pop %v1353
  %v1355 = vmul.f32 %v1319, 1.442695
  %v1356 = vpow.pop %v1355
  %v1357 = vmul.f32 %v1320, 1.442695
  %v1358 = vpow.pop %v1357
  %v1359 = vmul.f32 %v1321, 1.442695
  %v1360 = vpow.pop %v1359
  %v1361 = vmul.f32 %v1322, 1.442695
  %v1362 = vpow.pop %v1361
  %v1363 = vmul.f32 %v1323, 1.442695
  %v1364 = vpow.pop %v1363
  %v1365 = vmul.f32 %v1324, 1.442695
  %v1366 = vpow.pop %v1365
  %v1367 = vmul.f32 %v1325, 1.442695
  %v1368 = vpow.pop %v1367
  %v1369 = vmul.f32 %v1326, 1.442695
  %v1370 = vpow.pop %v1369
  %v1371 = vmul.f32 %v1327, 1.442695
  %v1372 = vpow.pop %v1371
  %v1373 = vmul.f32 %v1328, 1.442695
  %v1374 = vpow.pop %v1373
  %v1375 = vmul.f32 %v1329, 1.442695
  %v1376 = vpow.pop %v1375
  %v1377 = vmul.f32 %v1330, 1.442695
  %v1378 = vpow.pop %v1377
  %v1379 = vmul.f32 %v1331, 1.442695
  %v1380 = vpow.pop %v1379
  %v1381 = vmul.f32 %v1332, 1.442695
  %v1382 = vpow.pop %v1381
  %v1383 = vmul.f32 %v1333, 1.442695
  %v1384 = vpow.pop %v1383
  %v1385 = vmul.f32 %v1334, 1.442695
  %v1386 = vpow.pop %v1385
  %v1387 = vmul.f32 %v1335, 1.442695
  %v1388 = vpow.pop %v1387
  %v1389 = vmul.f32 %v1336, 1.442695
  %v1390 = vpow.pop %v1389
  %v1391 = vmul.f32 %v1337, 1.442695
  %v1392 = vpow.pop %v1391
  %v1393 = vmul.f32 %v1338, 1.442695
  %v1394 = vpow.pop %v1393
  %v1395 = vmul.f32 %v1339, 1.442695
  %v1396 = vpow.pop %v1395
  %v1397 = vmul.f32 %v1340, 1.442695
  %v1398 = vpow.pop %v1397
  %v1399 = vmul.f32 %v1341, 1.442695
  %v1400 = vpow.pop %v1399
  %v1401 = vmul.f32 %v1342, 1.442695
  %v1402 = vpow.pop %v1401
  %v1403 = vmul.f32 %v1343, 1.442695
  %v1404 = vpow.pop %v1403
  %v1405 = vmul.f32 %v1344, 1.442695
  %v1406 = vpow.pop %v1405
  %v1407 = vmul.f32 %v1345, 1.442695
  %v1408 = vpow.pop %v1407
  %v1409 = vmul.f32 %v1346, 1.442695
  %v1410 = vpow.pop %v1409
  %v1411 = vsel %vm455, %v1348, 0.0
  %1412 = vadd.xlane.f32.xlu0 %v1411
  %v1413 = vpop.xlane.xlu0 %1412
  %v1414 = vsel %vm455, %v1350, 0.0
  %1415 = vadd.xlane.f32.xlu0 %v1414
  %v1416 = vpop.xlane.xlu0 %1415
  %v1417 = vsel %vm455, %v1352, 0.0
  %1418 = vadd.xlane.f32.xlu0 %v1417
  %v1419 = vpop.xlane.xlu0 %1418
  %v1420 = vsel %vm455, %v1354, 0.0
  %1421 = vadd.xlane.f32.xlu0 %v1420
  %v1422 = vpop.xlane.xlu0 %1421
  %v1423 = vsel %vm455, %v1356, 0.0
  %1424 = vadd.xlane.f32.xlu0 %v1423
  %v1425 = vpop.xlane.xlu0 %1424
  %v1426 = vsel %vm455, %v1358, 0.0
  %1427 = vadd.xlane.f32.xlu0 %v1426
  %v1428 = vpop.xlane.xlu0 %1427
  %v1429 = vsel %vm455, %v1360, 0.0
  %1430 = vadd.xlane.f32.xlu0 %v1429
  %v1431 = vpop.xlane.xlu0 %1430
  %v1432 = vsel %vm455, %v1362, 0.0
  %1433 = vadd.xlane.f32.xlu0 %v1432
  %v1434 = vpop.xlane.xlu0 %1433
  %v1435 = vsel %vm455, %v1364, 0.0
  %1436 = vadd.xlane.f32.xlu0 %v1435
  %v1437 = vpop.xlane.xlu0 %1436
  %v1438 = vsel %vm455, %v1366, 0.0
  %1439 = vadd.xlane.f32.xlu0 %v1438
  %v1440 = vpop.xlane.xlu0 %1439
  %v1441 = vsel %vm455, %v1368, 0.0
  %1442 = vadd.xlane.f32.xlu0 %v1441
  %v1443 = vpop.xlane.xlu0 %1442
  %v1444 = vsel %vm455, %v1370, 0.0
  %1445 = vadd.xlane.f32.xlu0 %v1444
  %v1446 = vpop.xlane.xlu0 %1445
  %v1447 = vsel %vm455, %v1372, 0.0
  %1448 = vadd.xlane.f32.xlu0 %v1447
  %v1449 = vpop.xlane.xlu0 %1448
  %v1450 = vsel %vm455, %v1374, 0.0
  %1451 = vadd.xlane.f32.xlu0 %v1450
  %v1452 = vpop.xlane.xlu0 %1451
  %v1453 = vsel %vm455, %v1376, 0.0
  %1454 = vadd.xlane.f32.xlu0 %v1453
  %v1455 = vpop.xlane.xlu0 %1454
  %v1456 = vsel %vm455, %v1378, 0.0
  %1457 = vadd.xlane.f32.xlu0 %v1456
  %v1458 = vpop.xlane.xlu0 %1457
  %v1459 = vsel %vm455, %v1380, 0.0
  %1460 = vadd.xlane.f32.xlu0 %v1459
  %v1461 = vpop.xlane.xlu0 %1460
  %v1462 = vsel %vm455, %v1382, 0.0
  %1463 = vadd.xlane.f32.xlu0 %v1462
  %v1464 = vpop.xlane.xlu0 %1463
  %v1465 = vsel %vm455, %v1384, 0.0
  %1466 = vadd.xlane.f32.xlu0 %v1465
  %v1467 = vpop.xlane.xlu0 %1466
  %v1468 = vsel %vm455, %v1386, 0.0
  %1469 = vadd.xlane.f32.xlu0 %v1468
  %v1470 = vpop.xlane.xlu0 %1469
  %v1471 = vsel %vm455, %v1388, 0.0
  %1472 = vadd.xlane.f32.xlu0 %v1471
  %v1473 = vpop.xlane.xlu0 %1472
  %v1474 = vsel %vm455, %v1390, 0.0
  %1475 = vadd.xlane.f32.xlu0 %v1474
  %v1476 = vpop.xlane.xlu0 %1475
  %v1477 = vsel %vm455, %v1392, 0.0
  %1478 = vadd.xlane.f32.xlu0 %v1477
  %v1479 = vpop.xlane.xlu0 %1478
  %v1480 = vsel %vm455, %v1394, 0.0
  %1481 = vadd.xlane.f32.xlu0 %v1480
  %v1482 = vpop.xlane.xlu0 %1481
  %v1483 = vsel %vm455, %v1396, 0.0
  %1484 = vadd.xlane.f32.xlu0 %v1483
  %v1485 = vpop.xlane.xlu0 %1484
  %v1486 = vsel %vm455, %v1398, 0.0
  %1487 = vadd.xlane.f32.xlu0 %v1486
  %v1488 = vpop.xlane.xlu0 %1487
  %v1489 = vsel %vm455, %v1400, 0.0
  %1490 = vadd.xlane.f32.xlu0 %v1489
  %v1491 = vpop.xlane.xlu0 %1490
  %v1492 = vsel %vm455, %v1402, 0.0
  %1493 = vadd.xlane.f32.xlu0 %v1492
  %v1494 = vpop.xlane.xlu0 %1493
  %v1495 = vsel %vm455, %v1404, 0.0
  %1496 = vadd.xlane.f32.xlu0 %v1495
  %v1497 = vpop.xlane.xlu0 %1496
  %v1498 = vsel %vm455, %v1406, 0.0
  %1499 = vadd.xlane.f32.xlu0 %v1498
  %v1500 = vpop.xlane.xlu0 %1499
  %v1501 = vsel %vm455, %v1408, 0.0
  %1502 = vadd.xlane.f32.xlu0 %v1501
  %v1503 = vpop.xlane.xlu0 %1502
  %v1504 = vsel %vm455, %v1410, 0.0
  %1505 = vadd.xlane.f32.xlu0 %v1504
  %v1506 = vpop.xlane.xlu0 %1505
  %v1507 = vrcp.pop %v1413
  %v1508 = vrcp.pop %v1416
  %v1509 = vrcp.pop %v1419
  %v1510 = vrcp.pop %v1422
  %v1511 = vrcp.pop %v1425
  %v1512 = vrcp.pop %v1428
  %v1513 = vrcp.pop %v1431
  %v1514 = vrcp.pop %v1434
  %v1515 = vrcp.pop %v1437
  %v1516 = vrcp.pop %v1440
  %v1517 = vrcp.pop %v1443
  %v1518 = vrcp.pop %v1446
  %v1519 = vrcp.pop %v1449
  %v1520 = vrcp.pop %v1452
  %v1521 = vrcp.pop %v1455
  %v1522 = vrcp.pop %v1458
  %v1523 = vrcp.pop %v1461
  %v1524 = vrcp.pop %v1464
  %v1525 = vrcp.pop %v1467
  %v1526 = vrcp.pop %v1470
  %v1527 = vrcp.pop %v1473
  %v1528 = vrcp.pop %v1476
  %v1529 = vrcp.pop %v1479
  %v1530 = vrcp.pop %v1482
  %v1531 = vrcp.pop %v1485
  %v1532 = vrcp.pop %v1488
  %v1533 = vrcp.pop %v1491
  %v1534 = vrcp.pop %v1494
  %v1535 = vrcp.pop %v1497
  %v1536 = vrcp.pop %v1500
  %v1537 = vrcp.pop %v1503
  %v1538 = vrcp.pop %v1506
  %v1539 = vmul.f32 %v1348, %v1507
  %v1540 = vmul.f32 %v1350, %v1508
  %v1541 = vmul.f32 %v1352, %v1509
  %v1542 = vmul.f32 %v1354, %v1510
  %v1543 = vmul.f32 %v1356, %v1511
  %v1544 = vmul.f32 %v1358, %v1512
  %v1545 = vmul.f32 %v1360, %v1513
  %v1546 = vmul.f32 %v1362, %v1514
  %v1547 = vmul.f32 %v1364, %v1515
  %v1548 = vmul.f32 %v1366, %v1516
  %v1549 = vmul.f32 %v1368, %v1517
  %v1550 = vmul.f32 %v1370, %v1518
  %v1551 = vmul.f32 %v1372, %v1519
  %v1552 = vmul.f32 %v1374, %v1520
  %v1553 = vmul.f32 %v1376, %v1521
  %v1554 = vmul.f32 %v1378, %v1522
  %v1555 = vmul.f32 %v1380, %v1523
  %v1556 = vmul.f32 %v1382, %v1524
  %v1557 = vmul.f32 %v1384, %v1525
  %v1558 = vmul.f32 %v1386, %v1526
  %v1559 = vmul.f32 %v1388, %v1527
  %v1560 = vmul.f32 %v1390, %v1528
  %v1561 = vmul.f32 %v1392, %v1529
  %v1562 = vmul.f32 %v1394, %v1530
  %v1563 = vmul.f32 %v1396, %v1531
  %v1564 = vmul.f32 %v1398, %v1532
  %v1565 = vmul.f32 %v1400, %v1533
  %v1566 = vmul.f32 %v1402, %v1534
  %v1567 = vmul.f32 %v1404, %v1535
  %v1568 = vmul.f32 %v1406, %v1536
  %v1569 = vmul.f32 %v1408, %v1537
  %v1570 = vmul.f32 %v1410, %v1538
  %v1571 = vpack.c.bf16 %v1539, %v1539
  %v1572 = vpack.c.bf16 %v1540, %v1540
  %v1573 = vpack.c.bf16 %v1541, %v1541
  %v1574 = vpack.c.bf16 %v1542, %v1542
  %v1575 = vpack.c.bf16 %v1543, %v1543
  %v1576 = vpack.c.bf16 %v1544, %v1544
  %v1577 = vpack.c.bf16 %v1545, %v1545
  %v1578 = vpack.c.bf16 %v1546, %v1546
  %v1579 = vpack.c.bf16 %v1547, %v1547
  %v1580 = vpack.c.bf16 %v1548, %v1548
  %v1581 = vpack.c.bf16 %v1549, %v1549
  %v1582 = vpack.c.bf16 %v1550, %v1550
  %v1583 = vpack.c.bf16 %v1551, %v1551
  %v1584 = vpack.c.bf16 %v1552, %v1552
  %v1585 = vpack.c.bf16 %v1553, %v1553
  %v1586 = vpack.c.bf16 %v1554, %v1554
  %v1587 = vpack.c.bf16 %v1555, %v1555
  %v1588 = vpack.c.bf16 %v1556, %v1556
  %v1589 = vpack.c.bf16 %v1557, %v1557
  %v1590 = vpack.c.bf16 %v1558, %v1558
  %v1591 = vpack.c.bf16 %v1559, %v1559
  %v1592 = vpack.c.bf16 %v1560, %v1560
  %v1593 = vpack.c.bf16 %v1561, %v1561
  %v1594 = vpack.c.bf16 %v1562, %v1562
  %v1595 = vpack.c.bf16 %v1563, %v1563
  %v1596 = vpack.c.bf16 %v1564, %v1564
  %v1597 = vpack.c.bf16 %v1565, %v1565
  %v1598 = vpack.c.bf16 %v1566, %v1566
  %v1599 = vpack.c.bf16 %v1567, %v1567
  %v1600 = vpack.c.bf16 %v1568, %v1568
  %v1601 = vpack.c.bf16 %v1569, %v1569
  %v1602 = vpack.c.bf16 %v1570, %v1570
  %1603 = vrot.lane.b32.xlu0 %v452, 64
  %v1604 = vpop.permute.xlu0 %1603
  %v1606 = vsel %vm455, %v1571, 0
  %vm1608 = vcmask 1043456
  %v1610 = vsel %vm1608, %v1604, 0
  %1612 = vmatpush.bf16.msra.mxu0 0
  %1613 = vmatpush.bf16.msra.mxu0 0
  %1614 = vmatpush.bf16.msra.mxu0 0
  %1615 = vmatpush.bf16.msra.mxu0 0
  %1616 = vmatpush.bf16.msra.mxu0 0
  %1617 = vmatpush.bf16.msra.mxu0 0
  %1618 = vmatpush.bf16.msra.mxu0 0
  %1619 = vmatpush.bf16.msra.mxu0 %v1610
  %1620 = vmatmul.bf16.gmra.mxu0 %v1606
  %v1621 = vpop.f32.mrf.mxu0
  %v1622 = vadd.f32 0.0, %v1621
  %v1623 = vpop.f32.mrf.mxu0
  %1624 = vdwg.mxu0
  %1625 = vrot.lane.b32.xlu0 %v477, 64
  %v1626 = vpop.permute.xlu0 %1625
  %v1628 = vsel %vm455, %v1572, 0
  %v1631 = vsel %vm1608, %v1626, 0
  %1633 = vmatpush.bf16.msra.mxu0 0
  %1634 = vmatpush.bf16.msra.mxu0 0
  %1635 = vmatpush.bf16.msra.mxu0 0
  %1636 = vmatpush.bf16.msra.mxu0 0
  %1637 = vmatpush.bf16.msra.mxu0 0
  %1638 = vmatpush.bf16.msra.mxu0 0
  %1639 = vmatpush.bf16.msra.mxu0 0
  %1640 = vmatpush.bf16.msra.mxu0 %v1631
  %1641 = vmatmul.bf16.gmra.mxu0 %v1628
  %v1642 = vpop.f32.mrf.mxu0
  %v1643 = vadd.f32 0.0, %v1642
  %v1644 = vpop.f32.mrf.mxu0
  %1645 = vdwg.mxu0
  %1646 = vrot.lane.b32.xlu0 %v501, 64
  %v1647 = vpop.permute.xlu0 %1646
  %v1649 = vsel %vm455, %v1573, 0
  %v1652 = vsel %vm1608, %v1647, 0
  %1654 = vmatpush.bf16.msra.mxu0 0
  %1655 = vmatpush.bf16.msra.mxu0 0
  %1656 = vmatpush.bf16.msra.mxu0 0
  %1657 = vmatpush.bf16.msra.mxu0 0
  %1658 = vmatpush.bf16.msra.mxu0 0
  %1659 = vmatpush.bf16.msra.mxu0 0
  %1660 = vmatpush.bf16.msra.mxu0 0
  %1661 = vmatpush.bf16.msra.mxu0 %v1652
  %1662 = vmatmul.bf16.gmra.mxu0 %v1649
  %v1663 = vpop.f32.mrf.mxu0
  %v1664 = vadd.f32 0.0, %v1663
  %v1665 = vpop.f32.mrf.mxu0
  %1666 = vdwg.mxu0
  %1667 = vrot.lane.b32.xlu0 %v525, 64
  %v1668 = vpop.permute.xlu0 %1667
  %v1670 = vsel %vm455, %v1574, 0
  %v1673 = vsel %vm1608, %v1668, 0
  %1675 = vmatpush.bf16.msra.mxu0 0
  %1676 = vmatpush.bf16.msra.mxu0 0
  %1677 = vmatpush.bf16.msra.mxu0 0
  %1678 = vmatpush.bf16.msra.mxu0 0
  %1679 = vmatpush.bf16.msra.mxu0 0
  %1680 = vmatpush.bf16.msra.mxu0 0
  %1681 = vmatpush.bf16.msra.mxu0 0
  %1682 = vmatpush.bf16.msra.mxu0 %v1673
  %1683 = vmatmul.bf16.gmra.mxu0 %v1670
  %v1684 = vpop.f32.mrf.mxu0
  %v1685 = vadd.f32 0.0, %v1684
  %v1686 = vpop.f32.mrf.mxu0
  %1687 = vdwg.mxu0
  %1688 = vrot.lane.b32.xlu0 %v549, 64
  %v1689 = vpop.permute.xlu0 %1688
  %v1691 = vsel %vm455, %v1575, 0
  %v1694 = vsel %vm1608, %v1689, 0
  %1696 = vmatpush.bf16.msra.mxu0 0
  %1697 = vmatpush.bf16.msra.mxu0 0
  %1698 = vmatpush.bf16.msra.mxu0 0
  %1699 = vmatpush.bf16.msra.mxu0 0
  %1700 = vmatpush.bf16.msra.mxu0 0
  %1701 = vmatpush.bf16.msra.mxu0 0
  %1702 = vmatpush.bf16.msra.mxu0 0
  %1703 = vmatpush.bf16.msra.mxu0 %v1694
  %1704 = vmatmul.bf16.gmra.mxu0 %v1691
  %v1705 = vpop.f32.mrf.mxu0
  %v1706 = vadd.f32 0.0, %v1705
  %v1707 = vpop.f32.mrf.mxu0
  %1708 = vdwg.mxu0
  %1709 = vrot.lane.b32.xlu0 %v573, 64
  %v1710 = vpop.permute.xlu0 %1709
  %v1712 = vsel %vm455, %v1576, 0
  %v1715 = vsel %vm1608, %v1710, 0
  %1717 = vmatpush.bf16.msra.mxu0 0
  %1718 = vmatpush.bf16.msra.mxu0 0
  %1719 = vmatpush.bf16.msra.mxu0 0
  %1720 = vmatpush.bf16.msra.mxu0 0
  %1721 = vmatpush.bf16.msra.mxu0 0
  %1722 = vmatpush.bf16.msra.mxu0 0
  %1723 = vmatpush.bf16.msra.mxu0 0
  %1724 = vmatpush.bf16.msra.mxu0 %v1715
  %1725 = vmatmul.bf16.gmra.mxu0 %v1712
  %v1726 = vpop.f32.mrf.mxu0
  %v1727 = vadd.f32 0.0, %v1726
  %v1728 = vpop.f32.mrf.mxu0
  %1729 = vdwg.mxu0
  %1730 = vrot.lane.b32.xlu0 %v597, 64
  %v1731 = vpop.permute.xlu0 %1730
  %v1733 = vsel %vm455, %v1577, 0
  %v1736 = vsel %vm1608, %v1731, 0
  %1738 = vmatpush.bf16.msra.mxu0 0
  %1739 = vmatpush.bf16.msra.mxu0 0
  %1740 = vmatpush.bf16.msra.mxu0 0
  %1741 = vmatpush.bf16.msra.mxu0 0
  %1742 = vmatpush.bf16.msra.mxu0 0
  %1743 = vmatpush.bf16.msra.mxu0 0
  %1744 = vmatpush.bf16.msra.mxu0 0
  %1745 = vmatpush.bf16.msra.mxu0 %v1736
  %1746 = vmatmul.bf16.gmra.mxu0 %v1733
  %v1747 = vpop.f32.mrf.mxu0
  %v1748 = vadd.f32 0.0, %v1747
  %v1749 = vpop.f32.mrf.mxu0
  %1750 = vdwg.mxu0
  %1751 = vrot.lane.b32.xlu0 %v621, 64
  %v1752 = vpop.permute.xlu0 %1751
  %v1754 = vsel %vm455, %v1578, 0
  %v1757 = vsel %vm1608, %v1752, 0
  %1759 = vmatpush.bf16.msra.mxu0 0
  %1760 = vmatpush.bf16.msra.mxu0 0
  %1761 = vmatpush.bf16.msra.mxu0 0
  %1762 = vmatpush.bf16.msra.mxu0 0
  %1763 = vmatpush.bf16.msra.mxu0 0
  %1764 = vmatpush.bf16.msra.mxu0 0
  %1765 = vmatpush.bf16.msra.mxu0 0
  %1766 = vmatpush.bf16.msra.mxu0 %v1757
  %1767 = vmatmul.bf16.gmra.mxu0 %v1754
  %v1768 = vpop.f32.mrf.mxu0
  %v1769 = vadd.f32 0.0, %v1768
  %v1770 = vpop.f32.mrf.mxu0
  %1771 = vdwg.mxu0
  %1772 = vrot.lane.b32.xlu0 %v645, 64
  %v1773 = vpop.permute.xlu0 %1772
  %v1775 = vsel %vm455, %v1579, 0
  %v1778 = vsel %vm1608, %v1773, 0
  %1780 = vmatpush.bf16.msra.mxu0 0
  %1781 = vmatpush.bf16.msra.mxu0 0
  %1782 = vmatpush.bf16.msra.mxu0 0
  %1783 = vmatpush.bf16.msra.mxu0 0
  %1784 = vmatpush.bf16.msra.mxu0 0
  %1785 = vmatpush.bf16.msra.mxu0 0
  %1786 = vmatpush.bf16.msra.mxu0 0
  %1787 = vmatpush.bf16.msra.mxu0 %v1778
  %1788 = vmatmul.bf16.gmra.mxu0 %v1775
  %v1789 = vpop.f32.mrf.mxu0
  %v1790 = vadd.f32 0.0, %v1789
  %v1791 = vpop.f32.mrf.mxu0
  %1792 = vdwg.mxu0
  %1793 = vrot.lane.b32.xlu0 %v669, 64
  %v1794 = vpop.permute.xlu0 %1793
  %v1796 = vsel %vm455, %v1580, 0
  %v1799 = vsel %vm1608, %v1794, 0
  %1801 = vmatpush.bf16.msra.mxu0 0
  %1802 = vmatpush.bf16.msra.mxu0 0
  %1803 = vmatpush.bf16.msra.mxu0 0
  %1804 = vmatpush.bf16.msra.mxu0 0
  %1805 = vmatpush.bf16.msra.mxu0 0
  %1806 = vmatpush.bf16.msra.mxu0 0
  %1807 = vmatpush.bf16.msra.mxu0 0
  %1808 = vmatpush.bf16.msra.mxu0 %v1799
  %1809 = vmatmul.bf16.gmra.mxu0 %v1796
  %v1810 = vpop.f32.mrf.mxu0
  %v1811 = vadd.f32 0.0, %v1810
  %v1812 = vpop.f32.mrf.mxu0
  %1813 = vdwg.mxu0
  %1814 = vrot.lane.b32.xlu0 %v693, 64
  %v1815 = vpop.permute.xlu0 %1814
  %v1817 = vsel %vm455, %v1581, 0
  %v1820 = vsel %vm1608, %v1815, 0
  %1822 = vmatpush.bf16.msra.mxu0 0
  %1823 = vmatpush.bf16.msra.mxu0 0
  %1824 = vmatpush.bf16.msra.mxu0 0
  %1825 = vmatpush.bf16.msra.mxu0 0
  %1826 = vmatpush.bf16.msra.mxu0 0
  %1827 = vmatpush.bf16.msra.mxu0 0
  %1828 = vmatpush.bf16.msra.mxu0 0
  %1829 = vmatpush.bf16.msra.mxu0 %v1820
  %1830 = vmatmul.bf16.gmra.mxu0 %v1817
  %v1831 = vpop.f32.mrf.mxu0
  %v1832 = vadd.f32 0.0, %v1831
  %v1833 = vpop.f32.mrf.mxu0
  %1834 = vdwg.mxu0
  %1835 = vrot.lane.b32.xlu0 %v717, 64
  %v1836 = vpop.permute.xlu0 %1835
  %v1838 = vsel %vm455, %v1582, 0
  %v1841 = vsel %vm1608, %v1836, 0
  %1843 = vmatpush.bf16.msra.mxu0 0
  %1844 = vmatpush.bf16.msra.mxu0 0
  %1845 = vmatpush.bf16.msra.mxu0 0
  %1846 = vmatpush.bf16.msra.mxu0 0
  %1847 = vmatpush.bf16.msra.mxu0 0
  %1848 = vmatpush.bf16.msra.mxu0 0
  %1849 = vmatpush.bf16.msra.mxu0 0
  %1850 = vmatpush.bf16.msra.mxu0 %v1841
  %1851 = vmatmul.bf16.gmra.mxu0 %v1838
  %v1852 = vpop.f32.mrf.mxu0
  %v1853 = vadd.f32 0.0, %v1852
  %v1854 = vpop.f32.mrf.mxu0
  %1855 = vdwg.mxu0
  %1856 = vrot.lane.b32.xlu0 %v741, 64
  %v1857 = vpop.permute.xlu0 %1856
  %v1859 = vsel %vm455, %v1583, 0
  %v1862 = vsel %vm1608, %v1857, 0
  %1864 = vmatpush.bf16.msra.mxu0 0
  %1865 = vmatpush.bf16.msra.mxu0 0
  %1866 = vmatpush.bf16.msra.mxu0 0
  %1867 = vmatpush.bf16.msra.mxu0 0
  %1868 = vmatpush.bf16.msra.mxu0 0
  %1869 = vmatpush.bf16.msra.mxu0 0
  %1870 = vmatpush.bf16.msra.mxu0 0
  %1871 = vmatpush.bf16.msra.mxu0 %v1862
  %1872 = vmatmul.bf16.gmra.mxu0 %v1859
  %v1873 = vpop.f32.mrf.mxu0
  %v1874 = vadd.f32 0.0, %v1873
  %v1875 = vpop.f32.mrf.mxu0
  %1876 = vdwg.mxu0
  %1877 = vrot.lane.b32.xlu0 %v765, 64
  %v1878 = vpop.permute.xlu0 %1877
  %v1880 = vsel %vm455, %v1584, 0
  %v1883 = vsel %vm1608, %v1878, 0
  %1885 = vmatpush.bf16.msra.mxu0 0
  %1886 = vmatpush.bf16.msra.mxu0 0
  %1887 = vmatpush.bf16.msra.mxu0 0
  %1888 = vmatpush.bf16.msra.mxu0 0
  %1889 = vmatpush.bf16.msra.mxu0 0
  %1890 = vmatpush.bf16.msra.mxu0 0
  %1891 = vmatpush.bf16.msra.mxu0 0
  %1892 = vmatpush.bf16.msra.mxu0 %v1883
  %1893 = vmatmul.bf16.gmra.mxu0 %v1880
  %v1894 = vpop.f32.mrf.mxu0
  %v1895 = vadd.f32 0.0, %v1894
  %v1896 = vpop.f32.mrf.mxu0
  %1897 = vdwg.mxu0
  %1898 = vrot.lane.b32.xlu0 %v789, 64
  %v1899 = vpop.permute.xlu0 %1898
  %v1901 = vsel %vm455, %v1585, 0
  %v1904 = vsel %vm1608, %v1899, 0
  %1906 = vmatpush.bf16.msra.mxu0 0
  %1907 = vmatpush.bf16.msra.mxu0 0
  %1908 = vmatpush.bf16.msra.mxu0 0
  %1909 = vmatpush.bf16.msra.mxu0 0
  %1910 = vmatpush.bf16.msra.mxu0 0
  %1911 = vmatpush.bf16.msra.mxu0 0
  %1912 = vmatpush.bf16.msra.mxu0 0
  %1913 = vmatpush.bf16.msra.mxu0 %v1904
  %1914 = vmatmul.bf16.gmra.mxu0 %v1901
  %v1915 = vpop.f32.mrf.mxu0
  %v1916 = vadd.f32 0.0, %v1915
  %v1917 = vpop.f32.mrf.mxu0
  %1918 = vdwg.mxu0
  %1919 = vrot.lane.b32.xlu0 %v813, 64
  %v1920 = vpop.permute.xlu0 %1919
  %v1922 = vsel %vm455, %v1586, 0
  %v1925 = vsel %vm1608, %v1920, 0
  %1927 = vmatpush.bf16.msra.mxu0 0
  %1928 = vmatpush.bf16.msra.mxu0 0
  %1929 = vmatpush.bf16.msra.mxu0 0
  %1930 = vmatpush.bf16.msra.mxu0 0
  %1931 = vmatpush.bf16.msra.mxu0 0
  %1932 = vmatpush.bf16.msra.mxu0 0
  %1933 = vmatpush.bf16.msra.mxu0 0
  %1934 = vmatpush.bf16.msra.mxu0 %v1925
  %1935 = vmatmul.bf16.gmra.mxu0 %v1922
  %v1936 = vpop.f32.mrf.mxu0
  %v1937 = vadd.f32 0.0, %v1936
  %v1938 = vpop.f32.mrf.mxu0
  %1939 = vdwg.mxu0
  %1940 = vrot.lane.b32.xlu0 %v837, 64
  %v1941 = vpop.permute.xlu0 %1940
  %v1943 = vsel %vm455, %v1587, 0
  %v1946 = vsel %vm1608, %v1941, 0
  %1948 = vmatpush.bf16.msra.mxu0 0
  %1949 = vmatpush.bf16.msra.mxu0 0
  %1950 = vmatpush.bf16.msra.mxu0 0
  %1951 = vmatpush.bf16.msra.mxu0 0
  %1952 = vmatpush.bf16.msra.mxu0 0
  %1953 = vmatpush.bf16.msra.mxu0 0
  %1954 = vmatpush.bf16.msra.mxu0 0
  %1955 = vmatpush.bf16.msra.mxu0 %v1946
  %1956 = vmatmul.bf16.gmra.mxu0 %v1943
  %v1957 = vpop.f32.mrf.mxu0
  %v1958 = vadd.f32 0.0, %v1957
  %v1959 = vpop.f32.mrf.mxu0
  %1960 = vdwg.mxu0
  %1961 = vrot.lane.b32.xlu0 %v861, 64
  %v1962 = vpop.permute.xlu0 %1961
  %v1964 = vsel %vm455, %v1588, 0
  %v1967 = vsel %vm1608, %v1962, 0
  %1969 = vmatpush.bf16.msra.mxu0 0
  %1970 = vmatpush.bf16.msra.mxu0 0
  %1971 = vmatpush.bf16.msra.mxu0 0
  %1972 = vmatpush.bf16.msra.mxu0 0
  %1973 = vmatpush.bf16.msra.mxu0 0
  %1974 = vmatpush.bf16.msra.mxu0 0
  %1975 = vmatpush.bf16.msra.mxu0 0
  %1976 = vmatpush.bf16.msra.mxu0 %v1967
  %1977 = vmatmul.bf16.gmra.mxu0 %v1964
  %v1978 = vpop.f32.mrf.mxu0
  %v1979 = vadd.f32 0.0, %v1978
  %v1980 = vpop.f32.mrf.mxu0
  %1981 = vdwg.mxu0
  %1982 = vrot.lane.b32.xlu0 %v885, 64
  %v1983 = vpop.permute.xlu0 %1982
  %v1985 = vsel %vm455, %v1589, 0
  %v1988 = vsel %vm1608, %v1983, 0
  %1990 = vmatpush.bf16.msra.mxu0 0
  %1991 = vmatpush.bf16.msra.mxu0 0
  %1992 = vmatpush.bf16.msra.mxu0 0
  %1993 = vmatpush.bf16.msra.mxu0 0
  %1994 = vmatpush.bf16.msra.mxu0 0
  %1995 = vmatpush.bf16.msra.mxu0 0
  %1996 = vmatpush.bf16.msra.mxu0 0
  %1997 = vmatpush.bf16.msra.mxu0 %v1988
  %1998 = vmatmul.bf16.gmra.mxu0 %v1985
  %v1999 = vpop.f32.mrf.mxu0
  %v2000 = vadd.f32 0.0, %v1999
  %v2001 = vpop.f32.mrf.mxu0
  %2002 = vdwg.mxu0
  %2003 = vrot.lane.b32.xlu0 %v909, 64
  %v2004 = vpop.permute.xlu0 %2003
  %v2006 = vsel %vm455, %v1590, 0
  %v2009 = vsel %vm1608, %v2004, 0
  %2011 = vmatpush.bf16.msra.mxu0 0
  %2012 = vmatpush.bf16.msra.mxu0 0
  %2013 = vmatpush.bf16.msra.mxu0 0
  %2014 = vmatpush.bf16.msra.mxu0 0
  %2015 = vmatpush.bf16.msra.mxu0 0
  %2016 = vmatpush.bf16.msra.mxu0 0
  %2017 = vmatpush.bf16.msra.mxu0 0
  %2018 = vmatpush.bf16.msra.mxu0 %v2009
  %2019 = vmatmul.bf16.gmra.mxu0 %v2006
  %v2020 = vpop.f32.mrf.mxu0
  %v2021 = vadd.f32 0.0, %v2020
  %v2022 = vpop.f32.mrf.mxu0
  %2023 = vdwg.mxu0
  %2024 = vrot.lane.b32.xlu0 %v933, 64
  %v2025 = vpop.permute.xlu0 %2024
  %v2027 = vsel %vm455, %v1591, 0
  %v2030 = vsel %vm1608, %v2025, 0
  %2032 = vmatpush.bf16.msra.mxu0 0
  %2033 = vmatpush.bf16.msra.mxu0 0
  %2034 = vmatpush.bf16.msra.mxu0 0
  %2035 = vmatpush.bf16.msra.mxu0 0
  %2036 = vmatpush.bf16.msra.mxu0 0
  %2037 = vmatpush.bf16.msra.mxu0 0
  %2038 = vmatpush.bf16.msra.mxu0 0
  %2039 = vmatpush.bf16.msra.mxu0 %v2030
  %2040 = vmatmul.bf16.gmra.mxu0 %v2027
  %v2041 = vpop.f32.mrf.mxu0
  %v2042 = vadd.f32 0.0, %v2041
  %v2043 = vpop.f32.mrf.mxu0
  %2044 = vdwg.mxu0
  %2045 = vrot.lane.b32.xlu0 %v957, 64
  %v2046 = vpop.permute.xlu0 %2045
  %v2048 = vsel %vm455, %v1592, 0
  %v2051 = vsel %vm1608, %v2046, 0
  %2053 = vmatpush.bf16.msra.mxu0 0
  %2054 = vmatpush.bf16.msra.mxu0 0
  %2055 = vmatpush.bf16.msra.mxu0 0
  %2056 = vmatpush.bf16.msra.mxu0 0
  %2057 = vmatpush.bf16.msra.mxu0 0
  %2058 = vmatpush.bf16.msra.mxu0 0
  %2059 = vmatpush.bf16.msra.mxu0 0
  %2060 = vmatpush.bf16.msra.mxu0 %v2051
  %2061 = vmatmul.bf16.gmra.mxu0 %v2048
  %v2062 = vpop.f32.mrf.mxu0
  %v2063 = vadd.f32 0.0, %v2062
  %v2064 = vpop.f32.mrf.mxu0
  %2065 = vdwg.mxu0
  %2066 = vrot.lane.b32.xlu0 %v981, 64
  %v2067 = vpop.permute.xlu0 %2066
  %v2069 = vsel %vm455, %v1593, 0
  %v2072 = vsel %vm1608, %v2067, 0
  %2074 = vmatpush.bf16.msra.mxu0 0
  %2075 = vmatpush.bf16.msra.mxu0 0
  %2076 = vmatpush.bf16.msra.mxu0 0
  %2077 = vmatpush.bf16.msra.mxu0 0
  %2078 = vmatpush.bf16.msra.mxu0 0
  %2079 = vmatpush.bf16.msra.mxu0 0
  %2080 = vmatpush.bf16.msra.mxu0 0
  %2081 = vmatpush.bf16.msra.mxu0 %v2072
  %2082 = vmatmul.bf16.gmra.mxu0 %v2069
  %v2083 = vpop.f32.mrf.mxu0
  %v2084 = vadd.f32 0.0, %v2083
  %v2085 = vpop.f32.mrf.mxu0
  %2086 = vdwg.mxu0
  %2087 = vrot.lane.b32.xlu0 %v1005, 64
  %v2088 = vpop.permute.xlu0 %2087
  %v2090 = vsel %vm455, %v1594, 0
  %v2093 = vsel %vm1608, %v2088, 0
  %2095 = vmatpush.bf16.msra.mxu0 0
  %2096 = vmatpush.bf16.msra.mxu0 0
  %2097 = vmatpush.bf16.msra.mxu0 0
  %2098 = vmatpush.bf16.msra.mxu0 0
  %2099 = vmatpush.bf16.msra.mxu0 0
  %2100 = vmatpush.bf16.msra.mxu0 0
  %2101 = vmatpush.bf16.msra.mxu0 0
  %2102 = vmatpush.bf16.msra.mxu0 %v2093
  %2103 = vmatmul.bf16.gmra.mxu0 %v2090
  %v2104 = vpop.f32.mrf.mxu0
  %v2105 = vadd.f32 0.0, %v2104
  %v2106 = vpop.f32.mrf.mxu0
  %2107 = vdwg.mxu0
  %2108 = vrot.lane.b32.xlu0 %v1029, 64
  %v2109 = vpop.permute.xlu0 %2108
  %v2111 = vsel %vm455, %v1595, 0
  %v2114 = vsel %vm1608, %v2109, 0
  %2116 = vmatpush.bf16.msra.mxu0 0
  %2117 = vmatpush.bf16.msra.mxu0 0
  %2118 = vmatpush.bf16.msra.mxu0 0
  %2119 = vmatpush.bf16.msra.mxu0 0
  %2120 = vmatpush.bf16.msra.mxu0 0
  %2121 = vmatpush.bf16.msra.mxu0 0
  %2122 = vmatpush.bf16.msra.mxu0 0
  %2123 = vmatpush.bf16.msra.mxu0 %v2114
  %2124 = vmatmul.bf16.gmra.mxu0 %v2111
  %v2125 = vpop.f32.mrf.mxu0
  %v2126 = vadd.f32 0.0, %v2125
  %v2127 = vpop.f32.mrf.mxu0
  %2128 = vdwg.mxu0
  %2129 = vrot.lane.b32.xlu0 %v1053, 64
  %v2130 = vpop.permute.xlu0 %2129
  %v2132 = vsel %vm455, %v1596, 0
  %v2135 = vsel %vm1608, %v2130, 0
  %2137 = vmatpush.bf16.msra.mxu0 0
  %2138 = vmatpush.bf16.msra.mxu0 0
  %2139 = vmatpush.bf16.msra.mxu0 0
  %2140 = vmatpush.bf16.msra.mxu0 0
  %2141 = vmatpush.bf16.msra.mxu0 0
  %2142 = vmatpush.bf16.msra.mxu0 0
  %2143 = vmatpush.bf16.msra.mxu0 0
  %2144 = vmatpush.bf16.msra.mxu0 %v2135
  %2145 = vmatmul.bf16.gmra.mxu0 %v2132
  %v2146 = vpop.f32.mrf.mxu0
  %v2147 = vadd.f32 0.0, %v2146
  %v2148 = vpop.f32.mrf.mxu0
  %2149 = vdwg.mxu0
  %2150 = vrot.lane.b32.xlu0 %v1077, 64
  %v2151 = vpop.permute.xlu0 %2150
  %v2153 = vsel %vm455, %v1597, 0
  %v2156 = vsel %vm1608, %v2151, 0
  %2158 = vmatpush.bf16.msra.mxu0 0
  %2159 = vmatpush.bf16.msra.mxu0 0
  %2160 = vmatpush.bf16.msra.mxu0 0
  %2161 = vmatpush.bf16.msra.mxu0 0
  %2162 = vmatpush.bf16.msra.mxu0 0
  %2163 = vmatpush.bf16.msra.mxu0 0
  %2164 = vmatpush.bf16.msra.mxu0 0
  %2165 = vmatpush.bf16.msra.mxu0 %v2156
  %2166 = vmatmul.bf16.gmra.mxu0 %v2153
  %v2167 = vpop.f32.mrf.mxu0
  %v2168 = vadd.f32 0.0, %v2167
  %v2169 = vpop.f32.mrf.mxu0
  %2170 = vdwg.mxu0
  %2171 = vrot.lane.b32.xlu0 %v1101, 64
  %v2172 = vpop.permute.xlu0 %2171
  %v2174 = vsel %vm455, %v1598, 0
  %v2177 = vsel %vm1608, %v2172, 0
  %2179 = vmatpush.bf16.msra.mxu0 0
  %2180 = vmatpush.bf16.msra.mxu0 0
  %2181 = vmatpush.bf16.msra.mxu0 0
  %2182 = vmatpush.bf16.msra.mxu0 0
  %2183 = vmatpush.bf16.msra.mxu0 0
  %2184 = vmatpush.bf16.msra.mxu0 0
  %2185 = vmatpush.bf16.msra.mxu0 0
  %2186 = vmatpush.bf16.msra.mxu0 %v2177
  %2187 = vmatmul.bf16.gmra.mxu0 %v2174
  %v2188 = vpop.f32.mrf.mxu0
  %v2189 = vadd.f32 0.0, %v2188
  %v2190 = vpop.f32.mrf.mxu0
  %2191 = vdwg.mxu0
  %2192 = vrot.lane.b32.xlu0 %v1125, 64
  %v2193 = vpop.permute.xlu0 %2192
  %v2195 = vsel %vm455, %v1599, 0
  %v2198 = vsel %vm1608, %v2193, 0
  %2200 = vmatpush.bf16.msra.mxu0 0
  %2201 = vmatpush.bf16.msra.mxu0 0
  %2202 = vmatpush.bf16.msra.mxu0 0
  %2203 = vmatpush.bf16.msra.mxu0 0
  %2204 = vmatpush.bf16.msra.mxu0 0
  %2205 = vmatpush.bf16.msra.mxu0 0
  %2206 = vmatpush.bf16.msra.mxu0 0
  %2207 = vmatpush.bf16.msra.mxu0 %v2198
  %2208 = vmatmul.bf16.gmra.mxu0 %v2195
  %v2209 = vpop.f32.mrf.mxu0
  %v2210 = vadd.f32 0.0, %v2209
  %v2211 = vpop.f32.mrf.mxu0
  %2212 = vdwg.mxu0
  %2213 = vrot.lane.b32.xlu0 %v1149, 64
  %v2214 = vpop.permute.xlu0 %2213
  %v2216 = vsel %vm455, %v1600, 0
  %v2219 = vsel %vm1608, %v2214, 0
  %2221 = vmatpush.bf16.msra.mxu0 0
  %2222 = vmatpush.bf16.msra.mxu0 0
  %2223 = vmatpush.bf16.msra.mxu0 0
  %2224 = vmatpush.bf16.msra.mxu0 0
  %2225 = vmatpush.bf16.msra.mxu0 0
  %2226 = vmatpush.bf16.msra.mxu0 0
  %2227 = vmatpush.bf16.msra.mxu0 0
  %2228 = vmatpush.bf16.msra.mxu0 %v2219
  %2229 = vmatmul.bf16.gmra.mxu0 %v2216
  %v2230 = vpop.f32.mrf.mxu0
  %v2231 = vadd.f32 0.0, %v2230
  %v2232 = vpop.f32.mrf.mxu0
  %2233 = vdwg.mxu0
  %2234 = vrot.lane.b32.xlu0 %v1173, 64
  %v2235 = vpop.permute.xlu0 %2234
  %v2237 = vsel %vm455, %v1601, 0
  %v2240 = vsel %vm1608, %v2235, 0
  %2242 = vmatpush.bf16.msra.mxu0 0
  %2243 = vmatpush.bf16.msra.mxu0 0
  %2244 = vmatpush.bf16.msra.mxu0 0
  %2245 = vmatpush.bf16.msra.mxu0 0
  %2246 = vmatpush.bf16.msra.mxu0 0
  %2247 = vmatpush.bf16.msra.mxu0 0
  %2248 = vmatpush.bf16.msra.mxu0 0
  %2249 = vmatpush.bf16.msra.mxu0 %v2240
  %2250 = vmatmul.bf16.gmra.mxu0 %v2237
  %v2251 = vpop.f32.mrf.mxu0
  %v2252 = vadd.f32 0.0, %v2251
  %v2253 = vpop.f32.mrf.mxu0
  %2254 = vdwg.mxu0
  %2255 = vrot.lane.b32.xlu0 %v1197, 64
  %v2256 = vpop.permute.xlu0 %2255
  %v2258 = vsel %vm455, %v1602, 0
  %v2261 = vsel %vm1608, %v2256, 0
  %2263 = vmatpush.bf16.msra.mxu0 0
  %2264 = vmatpush.bf16.msra.mxu0 0
  %2265 = vmatpush.bf16.msra.mxu0 0
  %2266 = vmatpush.bf16.msra.mxu0 0
  %2267 = vmatpush.bf16.msra.mxu0 0
  %2268 = vmatpush.bf16.msra.mxu0 0
  %2269 = vmatpush.bf16.msra.mxu0 0
  %2270 = vmatpush.bf16.msra.mxu0 %v2261
  %2271 = vmatmul.bf16.gmra.mxu0 %v2258
  %v2272 = vpop.f32.mrf.mxu0
  %v2273 = vadd.f32 0.0, %v2272
  %v2274 = vpop.f32.mrf.mxu0
  %2275 = vdwg.mxu0
  %2284 = vrot.lane.b32.xlu0 %v1790, 8
  %v2285 = vpop.permute.xlu0 %2284
  %2286 = vrot.lane.b32.xlu0 %v1811, 8
  %v2287 = vpop.permute.xlu0 %2286
  %2288 = vrot.lane.b32.xlu0 %v1832, 8
  %v2289 = vpop.permute.xlu0 %2288
  %2290 = vrot.lane.b32.xlu0 %v1853, 8
  %v2291 = vpop.permute.xlu0 %2290
  %2292 = vrot.lane.b32.xlu0 %v1874, 8
  %v2293 = vpop.permute.xlu0 %2292
  %2294 = vrot.lane.b32.xlu0 %v1895, 8
  %v2295 = vpop.permute.xlu0 %2294
  %2296 = vrot.lane.b32.xlu0 %v1916, 8
  %v2297 = vpop.permute.xlu0 %2296
  %2298 = vrot.lane.b32.xlu0 %v1937, 8
  %v2299 = vpop.permute.xlu0 %2298
  %2316 = vrot.lane.b32.xlu0 %v1958, 16
  %v2317 = vpop.permute.xlu0 %2316
  %2318 = vrot.lane.b32.xlu0 %v1979, 16
  %v2319 = vpop.permute.xlu0 %2318
  %2320 = vrot.lane.b32.xlu0 %v2000, 16
  %v2321 = vpop.permute.xlu0 %2320
  %2322 = vrot.lane.b32.xlu0 %v2021, 16
  %v2323 = vpop.permute.xlu0 %2322
  %2324 = vrot.lane.b32.xlu0 %v2042, 16
  %v2325 = vpop.permute.xlu0 %2324
  %2326 = vrot.lane.b32.xlu0 %v2063, 16
  %v2327 = vpop.permute.xlu0 %2326
  %2328 = vrot.lane.b32.xlu0 %v2084, 16
  %v2329 = vpop.permute.xlu0 %2328
  %2330 = vrot.lane.b32.xlu0 %v2105, 16
  %v2331 = vpop.permute.xlu0 %2330
  %2348 = vrot.lane.b32.xlu0 %v2126, 24
  %v2349 = vpop.permute.xlu0 %2348
  %2350 = vrot.lane.b32.xlu0 %v2147, 24
  %v2351 = vpop.permute.xlu0 %2350
  %2352 = vrot.lane.b32.xlu0 %v2168, 24
  %v2353 = vpop.permute.xlu0 %2352
  %2354 = vrot.lane.b32.xlu0 %v2189, 24
  %v2355 = vpop.permute.xlu0 %2354
  %2356 = vrot.lane.b32.xlu0 %v2210, 24
  %v2357 = vpop.permute.xlu0 %2356
  %2358 = vrot.lane.b32.xlu0 %v2231, 24
  %v2359 = vpop.permute.xlu0 %2358
  %2360 = vrot.lane.b32.xlu0 %v2252, 24
  %v2361 = vpop.permute.xlu0 %2360
  %2362 = vrot.lane.b32.xlu0 %v2273, 24
  %v2363 = vpop.permute.xlu0 %2362
  %v2372 = vsel %vm455, %v1622, %v2285
  %v2373 = vsel %vm455, %v1643, %v2287
  %v2374 = vsel %vm455, %v1664, %v2289
  %v2375 = vsel %vm455, %v1685, %v2291
  %v2376 = vsel %vm455, %v1706, %v2293
  %v2377 = vsel %vm455, %v1727, %v2295
  %v2378 = vsel %vm455, %v1748, %v2297
  %v2379 = vsel %vm455, %v1769, %v2299
  %vm2380 = vcmask 130048
  %v2381 = vsel %vm2380, %v2372, %v2317
  %v2382 = vsel %vm2380, %v2373, %v2319
  %v2383 = vsel %vm2380, %v2374, %v2321
  %v2384 = vsel %vm2380, %v2375, %v2323
  %v2385 = vsel %vm2380, %v2376, %v2325
  %v2386 = vsel %vm2380, %v2377, %v2327
  %v2387 = vsel %vm2380, %v2378, %v2329
  %v2388 = vsel %vm2380, %v2379, %v2331
  %vm2389 = vcmask 195584
  %v2390 = vsel %vm2389, %v2381, %v2349
  %v2391 = vsel %vm2389, %v2382, %v2351
  %v2392 = vsel %vm2389, %v2383, %v2353
  %v2393 = vsel %vm2389, %v2384, %v2355
  %v2394 = vsel %vm2389, %v2385, %v2357
  %v2395 = vsel %vm2389, %v2386, %v2359
  %v2396 = vsel %vm2389, %v2387, %v2361
  %v2397 = vsel %vm2389, %v2388, %v2363
  %v2398 = vpack.c.bf16 %v2391, %v2390
  %v2399 = vpack.c.bf16 %v2393, %v2392
  %v2400 = vpack.c.bf16 %v2395, %v2394
  %v2401 = vpack.c.bf16 %v2397, %v2396
  %v2402 = vld [vmem:[%s5] sm:$0xf]
  %v2403 = vld [vmem:[%s5 + $0x4] sm:$0xf]
  %v2404 = vld [vmem:[%s5 + $0x8] sm:$0xf]
  %v2405 = vld [vmem:[%s5 + $0xc] sm:$0xf]
  %v2406 = vld [vmem:[%s6] sm:$0x1]
  %v2408 = vperm.slane %v2406, 0
  %v2414 = vunpack.c.l.b16 %v2402
  %v2415 = vunpack.c.l.b16 %v2403
  %v2416 = vunpack.c.l.b16 %v2404
  %v2417 = vunpack.c.l.b16 %v2405
  %v2418 = vpack.c.b16 %v2415, %v2414
  %v2419 = vpack.c.b16 %v2417, %v2416
  %v2423 = vsel %vm41, %v2398, 0
  %v2426 = vsel %vm41, %v2399, 0
  %v2429 = vsel %vm41, %v2400, 0
  %v2432 = vsel %vm41, %v2401, 0
  %2434 = vmatpush.bf16.msra.mxu0 0
  %2435 = vmatpush.bf16.msra.mxu0 0
  %2436 = vmatpush.bf16.msra.mxu0 0
  %2437 = vmatpush.bf16.msra.mxu0 0
  %2438 = vmatpush.bf16.msra.mxu0 0
  %2439 = vmatpush.bf16.msra.mxu0 0
  %2440 = vmatpush.bf16.msra.mxu0 %v2419
  %2441 = vmatpush.bf16.msra.mxu0 %v2418
  %2442 = vmatmul.bf16.gmra.mxu0 %v2423
  %v2443 = vpop.f32.mrf.mxu0
  %v2444 = vadd.f32 %v2408, %v2443
  %v2445 = vpop.f32.mrf.mxu0
  %v2446 = vadd.f32 %v2408, %v2445
  %2447 = vmatmul.bf16.gmra.mxu0 %v2426
  %v2448 = vpop.f32.mrf.mxu0
  %v2449 = vadd.f32 %v2408, %v2448
  %v2450 = vpop.f32.mrf.mxu0
  %v2451 = vadd.f32 %v2408, %v2450
  %2452 = vmatmul.bf16.gmra.mxu0 %v2429
  %v2453 = vpop.f32.mrf.mxu0
  %v2454 = vadd.f32 %v2408, %v2453
  %v2455 = vpop.f32.mrf.mxu0
  %v2456 = vadd.f32 %v2408, %v2455
  %2457 = vmatmul.bf16.gmra.mxu0 %v2432
  %v2458 = vpop.f32.mrf.mxu0
  %v2459 = vadd.f32 %v2408, %v2458
  %v2460 = vpop.f32.mrf.mxu0
  %v2461 = vadd.f32 %v2408, %v2460
  %2462 = vdwg.mxu0
  %v2463 = vpack.c.bf16 %v2446, %v2444
  %v2464 = vpack.c.bf16 %v2451, %v2449
  %v2465 = vpack.c.bf16 %v2456, %v2454
  %v2466 = vpack.c.bf16 %v2461, %v2459
  %v2467 = vld [vmem:[%s7] sm:$0xf]
  %v2468 = vld [vmem:[%s7 + $0x4] sm:$0xf]
  %v2469 = vld [vmem:[%s7 + $0x8] sm:$0xf]
  %v2470 = vld [vmem:[%s7 + $0xc] sm:$0xf]
  %v2471 = vld [vmem:[%s8] sm:$0x1]
  %v2473 = vperm.slane %v2471, 0
  %v2479 = vunpack.c.l.b16 %v2467
  %v2480 = vunpack.c.l.b16 %v2468
  %v2481 = vunpack.c.l.b16 %v2469
  %v2482 = vunpack.c.l.b16 %v2470
  %v2483 = vpack.c.b16 %v2480, %v2479
  %v2484 = vpack.c.b16 %v2482, %v2481
  %v2488 = vsel %vm41, %v2463, 0
  %v2491 = vsel %vm41, %v2464, 0
  %v2494 = vsel %vm41, %v2465, 0
  %v2497 = vsel %vm41, %v2466, 0
  %2499 = vmatpush.bf16.msra.mxu0 0
  %2500 = vmatpush.bf16.msra.mxu0 0
  %2501 = vmatpush.bf16.msra.mxu0 0
  %2502 = vmatpush.bf16.msra.mxu0 0
  %2503 = vmatpush.bf16.msra.mxu0 0
  %2504 = vmatpush.bf16.msra.mxu0 0
  %2505 = vmatpush.bf16.msra.mxu0 %v2484
  %2506 = vmatpush.bf16.msra.mxu0 %v2483
  %2507 = vmatmul.bf16.gmra.mxu0 %v2488
  %v2508 = vpop.f32.mrf.mxu0
  %v2509 = vadd.f32 %v2473, %v2508
  %v2510 = vpop.f32.mrf.mxu0
  %v2511 = vadd.f32 %v2473, %v2510
  %2512 = vmatmul.bf16.gmra.mxu0 %v2491
  %v2513 = vpop.f32.mrf.mxu0
  %v2514 = vadd.f32 %v2473, %v2513
  %v2515 = vpop.f32.mrf.mxu0
  %v2516 = vadd.f32 %v2473, %v2515
  %2517 = vmatmul.bf16.gmra.mxu0 %v2494
  %v2518 = vpop.f32.mrf.mxu0
  %v2519 = vadd.f32 %v2473, %v2518
  %v2520 = vpop.f32.mrf.mxu0
  %v2521 = vadd.f32 %v2473, %v2520
  %2522 = vmatmul.bf16.gmra.mxu0 %v2497
  %v2523 = vpop.f32.mrf.mxu0
  %v2524 = vadd.f32 %v2473, %v2523
  %v2525 = vpop.f32.mrf.mxu0
  %v2526 = vadd.f32 %v2473, %v2525
  %2527 = vdwg.mxu0
  %v2528 = vadd.f32 %v2509, %v33
  %v2529 = vadd.f32 %v2511, %v34
  %v2530 = vadd.f32 %v2514, %v35
  %v2531 = vadd.f32 %v2516, %v36
  %v2532 = vadd.f32 %v2519, %v37
  %v2533 = vadd.f32 %v2521, %v38
  %v2534 = vadd.f32 %v2524, %v39
  %v2535 = vadd.f32 %v2526, %v40
  %2536 = vst.msk [vmem:[%s9] sm:$0xff] %vm41, %v2528
  %2537 = vst.msk [vmem:[%s9 + $0x8] sm:$0xff] %vm41, %v2529
  %2538 = vst.msk [vmem:[%s9 + $0x10] sm:$0xff] %vm41, %v2530
  %2539 = vst.msk [vmem:[%s9 + $0x18] sm:$0xff] %vm41, %v2531
  %2540 = vst.msk [vmem:[%s9 + $0x20] sm:$0xff] %vm41, %v2532
  %2541 = vst.msk [vmem:[%s9 + $0x28] sm:$0xff] %vm41, %v2533
  %2542 = vst.msk [vmem:[%s9 + $0x30] sm:$0xff] %vm41, %v2534
  %2543 = vst.msk [vmem:[%s9 + $0x38] sm:$0xff] %vm41, %v2535
  // Predicated region
  $region38: #{btadapter_temp.1} parent=0 // pred_check
    _
  $region39: #{btadapter_temp.1} parent=0 // pred_check_branch
    %2545 = sbr.rel (0) target = $region41
  $region40: #{btadapter_temp.1} parent=0 // pred_region
    _
  $region41: #{btadapter_temp.1} parent=0 // pred_fallthru
    _
  // Predicated region
  $region42: #{btadapter_temp.1} parent=0 // pred_check
    _
  $region43: #{btadapter_temp.1} parent=0 // pred_check_branch
    %2547 = sbr.rel (0) target = $region45
  $region44: #{btadapter_temp.1} parent=0 // pred_region
    _
  $region45: #{btadapter_temp.1} parent=0 // pred_fallthru
    _

</llo_original>
